<compile_context>
chip_gen: v7x
topology: tpu7x:2x2x1
jax: 0.10.0
libtpu: 0.0.40
codegen_flags: <defaults>
</compile_context>

<pallas_src>
import math
import functools

import jax
import jax.numpy as jnp
from jax import lax
from jax.experimental import pallas as pl
from jax.experimental.pallas import tpu as pltpu


def _ceil_to(x, m):
    return ((x + m - 1) // m) * m


def _gmm_attention_kernel(x_ref, mu0_ref, logsig0_ref, pi0_ref, noise_ref,
                          out_ref, *, num_iter, epsilon, n_valid, mxu_bf16):
    two_pi = 2.0 * math.pi
    Bb, Np, D = x_ref.shape
    K = mu0_ref.shape[1]

    # ---- loop-invariant per-step setup (hoisted out of the EM loop) ----
    x = x_ref[...].astype(jnp.float32)                       # (Bb, Np, D)
    xcat = jnp.concatenate([x, x * x], axis=-1)              # (Bb, Np, 2D)
    xcat_mm = xcat.astype(jnp.bfloat16) if mxu_bf16 else xcat
    inv_n = 1.0 / float(n_valid)                             # true N, not Np

    if Np > n_valid:
        col = lax.broadcasted_iota(jnp.int32, (1, 1, Np), 2)
        pad_mask = (col < n_valid).astype(jnp.float32)       # (1, 1, Np)
    else:
        pad_mask = None

    mu = jnp.broadcast_to(mu0_ref[0].astype(jnp.float32)[None], (Bb, K, D))
    sigma = jnp.broadcast_to(
        jnp.exp(logsig0_ref[0].astype(jnp.float32))[None], (Bb, K, D))
    pi = jnp.broadcast_to(pi0_ref[...].astype(jnp.float32)[None], (Bb, K, 1))

    def em_iter(mu, sigma, pi):
        # ---- E-step: one fused (K, 2D) x (2D, N) MXU matmul per batch. ----
        # logits[k,n] = sum_d [-0.5 (x-mu)^2/(sig+eps) - 0.5 log(2*pi*sig+eps)]
        #             + log(pi_k+eps)
        #             = (mu/sig . x) - 0.5 (1/sig . x^2) + c_k
        inv_sig = 1.0 / (sigma + epsilon)                     # (Bb, K, D) exact
        a_mat = mu * inv_sig
        c = (-0.5 * jnp.sum(mu * a_mat + jnp.log(two_pi * sigma + epsilon),
                            axis=-1, keepdims=True)
             + jnp.log(pi + epsilon))                         # (Bb, K, 1)
        wcat = jnp.concatenate([a_mat, -0.5 * inv_sig], axis=-1)   # (Bb, K, 2D)
        if mxu_bf16:
            wcat = wcat.astype(jnp.bfloat16)
        logits = jnp.einsum('bkd,bnd->bkn', wcat, xcat_mm,
                            preferred_element_type=jnp.float32) + c  # (Bb,K,Np)

        # ---- softmax over the K slots (sublane axis); exact reciprocal. ----
        m = jnp.max(logits, axis=1, keepdims=True)            # (Bb, 1, Np)
        e = jnp.exp(logits - m)                               # EUP
        denom = jnp.sum(e, axis=1, keepdims=True)             # (Bb, 1, Np)
        gamma = e * (1.0 / denom)                              # (Bb, K, Np)
        if pad_mask is not None:
            gamma = gamma * pad_mask                           # zero padded cols

        # ---- M-step: fused sufficient statistics via gamma @ xcat. ----
        s = jnp.sum(gamma, axis=2, keepdims=True)              # (Bb, K, 1)
        pi_new = s * inv_n                                     # mean over true N
        gsum = s + epsilon
        inv_gsum = 1.0 / gsum                                  # tiny, exact
        gamma_mm = gamma.astype(jnp.bfloat16) if mxu_bf16 else gamma
        gxcat = jnp.einsum('bkn,bnd->bkd', gamma_mm, xcat_mm,
                           preferred_element_type=jnp.float32)  # (Bb, K, 2D)
        gx = gxcat[..., :D]
        gx2 = gxcat[..., D:]
        mu_new = gx * inv_gsum
        # sum_n gamma*(x-mu)^2 / gsum == gx2/gsum - mu^2*(2 - s/gsum); the exact
        # value is nonnegative, the clamp only guards FP cancellation.
        sigma_new = jnp.maximum(
            gx2 * inv_gsum - mu_new * mu_new * (2.0 - s * inv_gsum), 0.0)
        return mu_new, sigma_new, pi_new

    if num_iter <= 8:
        # Typical EM chains (3-7 iters): full unroll for scheduler visibility.
        for _ in range(num_iter):
            mu, sigma, pi = em_iter(mu, sigma, pi)
    else:
        # Long chains: carried loop, partially unrolled.
        mu, sigma, pi = lax.fori_loop(
            0, num_iter, lambda _, carry: em_iter(*carry), (mu, sigma, pi),
            unroll=2)

    # slots = mu + sigma * noise  (noise ~ N(0,1), drawn in the wrapper to
    # mirror the module's torch.randn(B, K, D)).
    slots = mu + sigma * noise_ref[...].astype(jnp.float32)    # (Bb, K, D)

    # Lane-dense (Bb, 1, K*D) output slab -> dense writeback DMA.
    for k in range(K):
        out_ref[:, :, k * D:(k + 1) * D] = \
            slots[:, k:k + 1, :].astype(out_ref.dtype)


def gmm_attention(inputs, slots_mu, slots_log_sigma, mixing_coefficients,
                  noise, num_iter, epsilon=1e-8, *, mxu_bf16=False):
    """Pallas wrapper.  inputs: (B, N, D); returns slots: (B, K, D).

    mxu_bf16=True casts only the MXU operands to bf16 (f32 accumulation and
    f32 elementwise math) — the v6e/v7x throughput lever; keep False when
    bit-close parity with the PyTorch reference is required.
    """
    B, N, D = inputs.shape
    _, K, _ = slots_mu.shape
    out_dtype = inputs.dtype

    # ---- shape plumbing: lane-pad N, pick B_block, batch-pad B. ----
    N_pad = _ceil_to(N, 128)
    bytes_per_batch = N_pad * D * 4
    # ~1 MiB of x per grid step so the per-step DMA is dense and the
    # ~0.35 us/step grid overhead is amortized.
    b_target = max(1, (1 << 20) // bytes_per_batch)
    B_block = max(1, min(b_target, B))
    # Keep >= 2 grid steps when B >= 2 so both v7x TensorCores get work
    # (costs at most one extra tiny grid step on single-TC v5e/v6e).
    if B >= 2:
        B_block = min(B_block, -(-B // 2))
    G = -(-B // B_block)
    B_pad = G * B_block

    x_p = inputs
    if N_pad > N or B_pad > B:
        x_p = jnp.pad(inputs, ((0, B_pad - B), (0, N_pad - N), (0, 0)))
    noise_p = noise
    if B_pad > B:
        noise_p = jnp.pad(noise, ((0, B_pad - B), (0, 0), (0, 0)))

    # (K, 1) column keeps pi broadcastable against the (K, N) layout with no
    # in-kernel transpose.
    pi_col = mixing_coefficients.reshape(K, 1)

    # ---- explicit VMEM budget; cap at 48 MiB (v7x has only 64 MiB/TC). ----
    in_item = jnp.dtype(inputs.dtype).itemsize
    f32 = 4
    est = (2 * B_block * N_pad * D * in_item            # double-buffered x block
           + 3 * B_block * N_pad * D * f32              # x (f32) + xcat (2D)
           + (B_block * N_pad * D * 2 if mxu_bf16 else 0)   # bf16 xcat copy
           + 5 * B_block * K * N_pad * f32              # logits/exp/gamma/mask
           + 20 * B_block * K * D * f32)                # params/stats/noise/out
    vmem_limit = int(min(max(2 * est, 32 << 20), 48 << 20))

    kernel = functools.partial(
        _gmm_attention_kernel, num_iter=num_iter, epsilon=epsilon,
        n_valid=N, mxu_bf16=mxu_bf16)

    out = pl.pallas_call(
        kernel,
        out_shape=jax.ShapeDtypeStruct((B_pad, 1, K * D), out_dtype),
        grid=(G,),
        in_specs=[
            pl.BlockSpec((B_block, N_pad, D), lambda b: (b, 0, 0)),  # inputs
            pl.BlockSpec((1, K, D), lambda b: (0, 0, 0)),            # slots_mu
            pl.BlockSpec((1, K, D), lambda b: (0, 0, 0)),            # log_sigma
            pl.BlockSpec((K, 1), lambda b: (0, 0)),                  # mixing pi
            pl.BlockSpec((B_block, K, D), lambda b: (b, 0, 0)),      # noise
        ],
        out_specs=pl.BlockSpec((B_block, 1, K * D), lambda b: (b, 0, 0)),
        compiler_params=pltpu.CompilerParams(
            dimension_semantics=("parallel",),   # shards batch steps over TCs
            vmem_limit_bytes=vmem_limit),
    )(x_p, slots_mu, slots_log_sigma, pi_col, noise_p)

    return out[:B, 0, :].reshape(B, K, D)


if __name__ == "__main__":
    # Small shapes consistent with the module's forward: (B, N, D) inputs,
    # K slots, a few EM iterations.
    B, N, D, K = 2, 16, 32, 4
    num_iter = 3

    key = jax.random.PRNGKey(0)
    k_in, k_mu, k_sig, k_noise = jax.random.split(key, 4)

    inputs = jax.random.normal(k_in, (B, N, D), dtype=jnp.float32)

    # Deterministic parameter init matching nn.init.xavier_uniform_ on a
    # (1, K, D) tensor: fan_in = K*D, fan_out = 1*D.
    bound = math.sqrt(6.0 / (K * D + 1 * D))
    slots_mu = jax.random.uniform(k_mu, (1, K, D), dtype=jnp.float32,
                                  minval=-bound, maxval=bound)
    slots_log_sigma = jax.random.uniform(k_sig, (1, K, D), dtype=jnp.float32,
                                         minval=-bound, maxval=bound)
    mixing_coefficients = jnp.full((1, K), 1.0 / K, dtype=jnp.float32)

    # torch.randn(B, K, D) equivalent — generated here deterministically.
    noise = jax.random.normal(k_noise, (B, K, D), dtype=jnp.float32)

    slots = gmm_attention(inputs, slots_mu, slots_log_sigma,
                          mixing_coefficients, noise, num_iter)
    jax.block_until_ready(slots)
    assert slots.shape == (B, K, D)
    assert bool(jnp.all(jnp.isfinite(slots)))
    print("KERNEL_OK")
</pallas_src>

<mosaic_0001>
module attributes {stable_mosaic.version = 11 : i64} {
  func.func @_gmm_attention_kernel(%arg0: i32, %arg1: memref<1x128x32xf32, #tpu.memory_space<vmem>>, %arg2: memref<1x4x32xf32, #tpu.memory_space<vmem>>, %arg3: memref<1x4x32xf32, #tpu.memory_space<vmem>>, %arg4: memref<4x1xf32, #tpu.memory_space<vmem>>, %arg5: memref<1x4x32xf32, #tpu.memory_space<vmem>>, %arg6: memref<1x1x128xf32, #tpu.memory_space<vmem>>) attributes {dimension_semantics = [#tpu.dimension_semantics<parallel>], iteration_bounds = array<i64: 2>, scalar_prefetch = 0 : i64, scratch_operands = 0 : i64, tpu.core_type = #tpu.core_type<tc>, window_params = [{transform_indices = @transform_0, window_bounds = array<i64: 1, 128, 32>}, {pipeline_mode = #tpu.pipeline_mode<synchronous>, transform_indices = @transform_1, window_bounds = array<i64: 1, 4, 32>}, {pipeline_mode = #tpu.pipeline_mode<synchronous>, transform_indices = @transform_2, window_bounds = array<i64: 1, 4, 32>}, {pipeline_mode = #tpu.pipeline_mode<synchronous>, transform_indices = @transform_3, window_bounds = array<i64: 4, 1>}, {transform_indices = @transform_4, window_bounds = array<i64: 1, 4, 32>}, {transform_indices = @transform_5, window_bounds = array<i64: 1, 1, 128>}]} {
    %c0 = arith.constant 0 : index
    %c0_0 = arith.constant 0 : index
    %c0_1 = arith.constant 0 : index
    %0 = vector.load %arg1[%c0, %c0_0, %c0_1] : memref<1x128x32xf32, #tpu.memory_space<vmem>>, vector<1x128x32xf32>
    %1 = arith.mulf %0, %0 : vector<1x128x32xf32>
    %2 = tpu.concatenate %0, %1 in 2 : vector<1x128x32xf32>, vector<1x128x32xf32> -> vector<1x128x64xf32>
    %3 = tpu.iota {dimensions = array<i32: 2>} : vector<1x1x128xi32>
    %c16_i32 = arith.constant 16 : i32
    %4 = vector.broadcast %c16_i32 : i32 to vector<1x1x128xi32>
    %5 = arith.cmpi slt, %3, %4 : vector<1x1x128xi32>
    %6 = arith.extui %5 : vector<1x1x128xi1> to vector<1x1x128xi32>
    %7 = arith.sitofp %6 : vector<1x1x128xi32> to vector<1x1x128xf32>
    %c0_2 = arith.constant 0 : index
    %c0_3 = arith.constant 0 : index
    %c0_4 = arith.constant 0 : index
    %8 = vector.load %arg2[%c0_2, %c0_3, %c0_4] : memref<1x4x32xf32, #tpu.memory_space<vmem>>, vector<1x4x32xf32>
    %9 = vector.shape_cast %8 : vector<1x4x32xf32> to vector<4x32xf32>
    %10 = vector.shape_cast %9 : vector<4x32xf32> to vector<1x4x32xf32>
    %c0_5 = arith.constant 0 : index
    %c0_6 = arith.constant 0 : index
    %c0_7 = arith.constant 0 : index
    %11 = vector.load %arg3[%c0_5, %c0_6, %c0_7] : memref<1x4x32xf32, #tpu.memory_space<vmem>>, vector<1x4x32xf32>
    %12 = vector.shape_cast %11 : vector<1x4x32xf32> to vector<4x32xf32>
    %13 = math.exp %12 : vector<4x32xf32>
    %14 = vector.shape_cast %13 : vector<4x32xf32> to vector<1x4x32xf32>
    %c0_8 = arith.constant 0 : index
    %c0_9 = arith.constant 0 : index
    %15 = vector.load %arg4[%c0_8, %c0_9] : memref<4x1xf32, #tpu.memory_space<vmem>>, vector<4x1xf32>
    %16 = vector.shape_cast %15 : vector<4x1xf32> to vector<1x4x1xf32>
    %cst = arith.constant 9.99999993E-9 : f32
    %17 = vector.broadcast %cst : f32 to vector<1x4x32xf32>
    %18 = arith.addf %14, %17 : vector<1x4x32xf32>
    %cst_10 = arith.constant 1.000000e+00 : f32
    %19 = vector.broadcast %cst_10 : f32 to vector<1x4x32xf32>
    %20 = arith.divf %19, %18 : vector<1x4x32xf32>
    %21 = arith.mulf %10, %20 : vector<1x4x32xf32>
    %22 = arith.mulf %10, %21 : vector<1x4x32xf32>
    %cst_11 = arith.constant 6.28318548 : f32
    %23 = vector.broadcast %cst_11 : f32 to vector<1x4x32xf32>
    %24 = arith.mulf %23, %14 : vector<1x4x32xf32>
    %cst_12 = arith.constant 9.99999993E-9 : f32
    %25 = vector.broadcast %cst_12 : f32 to vector<1x4x32xf32>
    %26 = arith.addf %24, %25 : vector<1x4x32xf32>
    %27 = math.log %26 : vector<1x4x32xf32>
    %28 = arith.addf %22, %27 : vector<1x4x32xf32>
    %cst_13 = arith.constant dense<0.000000e+00> : vector<1x4xf32>
    %29 = vector.multi_reduction <add>, %28, %cst_13 [2] : vector<1x4x32xf32> to vector<1x4xf32>
    %30 = vector.shape_cast %29 : vector<1x4xf32> to vector<1x4x1xf32>
    %cst_14 = arith.constant -5.000000e-01 : f32
    %31 = vector.broadcast %cst_14 : f32 to vector<1x4x1xf32>
    %32 = arith.mulf %31, %30 : vector<1x4x1xf32>
    %cst_15 = arith.constant 9.99999993E-9 : f32
    %33 = vector.broadcast %cst_15 : f32 to vector<1x4x1xf32>
    %34 = arith.addf %16, %33 : vector<1x4x1xf32>
    %35 = math.log %34 : vector<1x4x1xf32>
    %36 = arith.addf %32, %35 : vector<1x4x1xf32>
    %cst_16 = arith.constant -5.000000e-01 : f32
    %37 = vector.broadcast %cst_16 : f32 to vector<1x4x32xf32>
    %38 = arith.mulf %37, %20 : vector<1x4x32xf32>
    %39 = tpu.concatenate %21, %38 in 2 : vector<1x4x32xf32>, vector<1x4x32xf32> -> vector<1x4x64xf32>
    "tpu.trace_start"() <{level = 10 : i32, message = "bkd,bnd->bkn"}> : () -> ()
    %cst_17 = arith.constant dense<0.000000e+00> : vector<1x4x128xf32>
    %40 = tpu.matmul %39, %2, %cst_17 {dimension_numbers = #tpu.dot_dimension_numbers<[2], [2], [1], [1], [0, 0, 0, 1, 1, 1], [0], [0]>} : vector<1x4x64xf32>, vector<1x128x64xf32>, vector<1x4x128xf32> -> vector<1x4x128xf32>
    "tpu.trace_stop"() : () -> ()
    %41 = vector.broadcast %36 : vector<1x4x1xf32> to vector<1x4x128xf32>
    %42 = arith.addf %40, %41 : vector<1x4x128xf32>
    %cst_18 = arith.constant dense<0xFF800000> : vector<1x128xf32>
    %43 = vector.multi_reduction <maximumf>, %42, %cst_18 [1] : vector<1x4x128xf32> to vector<1x128xf32>
    %44 = vector.shape_cast %43 : vector<1x128xf32> to vector<1x1x128xf32>
    %45 = vector.broadcast %44 : vector<1x1x128xf32> to vector<1x4x128xf32>
    %46 = arith.subf %42, %45 : vector<1x4x128xf32>
    %47 = math.exp %46 : vector<1x4x128xf32>
    %cst_19 = arith.constant dense<0.000000e+00> : vector<1x128xf32>
    %48 = vector.multi_reduction <add>, %47, %cst_19 [1] : vector<1x4x128xf32> to vector<1x128xf32>
    %49 = vector.shape_cast %48 : vector<1x128xf32> to vector<1x1x128xf32>
    %cst_20 = arith.constant 1.000000e+00 : f32
    %50 = vector.broadcast %cst_20 : f32 to vector<1x1x128xf32>
    %51 = arith.divf %50, %49 : vector<1x1x128xf32>
    %52 = vector.broadcast %51 : vector<1x1x128xf32> to vector<1x4x128xf32>
    %53 = arith.mulf %47, %52 : vector<1x4x128xf32>
    %54 = vector.broadcast %7 : vector<1x1x128xf32> to vector<1x4x128xf32>
    %55 = arith.mulf %53, %54 : vector<1x4x128xf32>
    %cst_21 = arith.constant dense<0.000000e+00> : vector<1x4xf32>
    %56 = vector.multi_reduction <add>, %55, %cst_21 [2] : vector<1x4x128xf32> to vector<1x4xf32>
    %57 = vector.shape_cast %56 : vector<1x4xf32> to vector<1x4x1xf32>
    %cst_22 = arith.constant 6.250000e-02 : f32
    %58 = vector.broadcast %cst_22 : f32 to vector<1x4x1xf32>
    %59 = arith.mulf %57, %58 : vector<1x4x1xf32>
    %cst_23 = arith.constant 9.99999993E-9 : f32
    %60 = vector.broadcast %cst_23 : f32 to vector<1x4x1xf32>
    %61 = arith.addf %57, %60 : vector<1x4x1xf32>
    %cst_24 = arith.constant 1.000000e+00 : f32
    %62 = vector.broadcast %cst_24 : f32 to vector<1x4x1xf32>
    %63 = arith.divf %62, %61 : vector<1x4x1xf32>
    "tpu.trace_start"() <{level = 10 : i32, message = "bkn,bnd->bkd"}> : () -> ()
    %cst_25 = arith.constant dense<0.000000e+00> : vector<1x4x64xf32>
    %64 = tpu.matmul %55, %2, %cst_25 {dimension_numbers = #tpu.dot_dimension_numbers<[2], [1], [1], [2], [0, 0, 0, 1, 1, 2], [0], [0]>} : vector<1x4x128xf32>, vector<1x128x64xf32>, vector<1x4x64xf32> -> vector<1x4x64xf32>
    "tpu.trace_stop"() : () -> ()
    %65 = vector.extract_strided_slice %64 {offsets = [0, 0, 0], sizes = [1, 4, 32], strides = [1, 1, 1]} : vector<1x4x64xf32> to vector<1x4x32xf32>
    %66 = vector.extract_strided_slice %64 {offsets = [0, 0, 32], sizes = [1, 4, 32], strides = [1, 1, 1]} : vector<1x4x64xf32> to vector<1x4x32xf32>
    %67 = vector.broadcast %63 : vector<1x4x1xf32> to vector<1x4x32xf32>
    %68 = arith.mulf %65, %67 : vector<1x4x32xf32>
    %69 = vector.broadcast %63 : vector<1x4x1xf32> to vector<1x4x32xf32>
    %70 = arith.mulf %66, %69 : vector<1x4x32xf32>
    %71 = arith.mulf %68, %68 : vector<1x4x32xf32>
    %72 = arith.mulf %57, %63 : vector<1x4x1xf32>
    %cst_26 = arith.constant 2.000000e+00 : f32
    %73 = vector.broadcast %cst_26 : f32 to vector<1x4x1xf32>
    %74 = arith.subf %73, %72 : vector<1x4x1xf32>
    %75 = vector.broadcast %74 : vector<1x4x1xf32> to vector<1x4x32xf32>
    %76 = arith.mulf %71, %75 : vector<1x4x32xf32>
    %77 = arith.subf %70, %76 : vector<1x4x32xf32>
    %cst_27 = arith.constant 0.000000e+00 : f32
    %78 = vector.broadcast %cst_27 : f32 to vector<1x4x32xf32>
    %79 = arith.maximumf %77, %78 : vector<1x4x32xf32>
    %cst_28 = arith.constant 9.99999993E-9 : f32
    %80 = vector.broadcast %cst_28 : f32 to vector<1x4x32xf32>
    %81 = arith.addf %79, %80 : vector<1x4x32xf32>
    %cst_29 = arith.constant 1.000000e+00 : f32
    %82 = vector.broadcast %cst_29 : f32 to vector<1x4x32xf32>
    %83 = arith.divf %82, %81 : vector<1x4x32xf32>
    %84 = arith.mulf %68, %83 : vector<1x4x32xf32>
    %85 = arith.mulf %68, %84 : vector<1x4x32xf32>
    %cst_30 = arith.constant 6.28318548 : f32
    %86 = vector.broadcast %cst_30 : f32 to vector<1x4x32xf32>
    %87 = arith.mulf %86, %79 : vector<1x4x32xf32>
    %cst_31 = arith.constant 9.99999993E-9 : f32
    %88 = vector.broadcast %cst_31 : f32 to vector<1x4x32xf32>
    %89 = arith.addf %87, %88 : vector<1x4x32xf32>
    %90 = math.log %89 : vector<1x4x32xf32>
    %91 = arith.addf %85, %90 : vector<1x4x32xf32>
    %cst_32 = arith.constant dense<0.000000e+00> : vector<1x4xf32>
    %92 = vector.multi_reduction <add>, %91, %cst_32 [2] : vector<1x4x32xf32> to vector<1x4xf32>
    %93 = vector.shape_cast %92 : vector<1x4xf32> to vector<1x4x1xf32>
    %cst_33 = arith.constant -5.000000e-01 : f32
    %94 = vector.broadcast %cst_33 : f32 to vector<1x4x1xf32>
    %95 = arith.mulf %94, %93 : vector<1x4x1xf32>
    %cst_34 = arith.constant 9.99999993E-9 : f32
    %96 = vector.broadcast %cst_34 : f32 to vector<1x4x1xf32>
    %97 = arith.addf %59, %96 : vector<1x4x1xf32>
    %98 = math.log %97 : vector<1x4x1xf32>
    %99 = arith.addf %95, %98 : vector<1x4x1xf32>
    %cst_35 = arith.constant -5.000000e-01 : f32
    %100 = vector.broadcast %cst_35 : f32 to vector<1x4x32xf32>
    %101 = arith.mulf %100, %83 : vector<1x4x32xf32>
    %102 = tpu.concatenate %84, %101 in 2 : vector<1x4x32xf32>, vector<1x4x32xf32> -> vector<1x4x64xf32>
    "tpu.trace_start"() <{level = 10 : i32, message = "bkd,bnd->bkn"}> : () -> ()
    %cst_36 = arith.constant dense<0.000000e+00> : vector<1x4x128xf32>
    %103 = tpu.matmul %102, %2, %cst_36 {dimension_numbers = #tpu.dot_dimension_numbers<[2], [2], [1], [1], [0, 0, 0, 1, 1, 1], [0], [0]>} : vector<1x4x64xf32>, vector<1x128x64xf32>, vector<1x4x128xf32> -> vector<1x4x128xf32>
    "tpu.trace_stop"() : () -> ()
    %104 = vector.broadcast %99 : vector<1x4x1xf32> to vector<1x4x128xf32>
    %105 = arith.addf %103, %104 : vector<1x4x128xf32>
    %cst_37 = arith.constant dense<0xFF800000> : vector<1x128xf32>
    %106 = vector.multi_reduction <maximumf>, %105, %cst_37 [1] : vector<1x4x128xf32> to vector<1x128xf32>
    %107 = vector.shape_cast %106 : vector<1x128xf32> to vector<1x1x128xf32>
    %108 = vector.broadcast %107 : vector<1x1x128xf32> to vector<1x4x128xf32>
    %109 = arith.subf %105, %108 : vector<1x4x128xf32>
    %110 = math.exp %109 : vector<1x4x128xf32>
    %cst_38 = arith.constant dense<0.000000e+00> : vector<1x128xf32>
    %111 = vector.multi_reduction <add>, %110, %cst_38 [1] : vector<1x4x128xf32> to vector<1x128xf32>
    %112 = vector.shape_cast %111 : vector<1x128xf32> to vector<1x1x128xf32>
    %cst_39 = arith.constant 1.000000e+00 : f32
    %113 = vector.broadcast %cst_39 : f32 to vector<1x1x128xf32>
    %114 = arith.divf %113, %112 : vector<1x1x128xf32>
    %115 = vector.broadcast %114 : vector<1x1x128xf32> to vector<1x4x128xf32>
    %116 = arith.mulf %110, %115 : vector<1x4x128xf32>
    %117 = vector.broadcast %7 : vector<1x1x128xf32> to vector<1x4x128xf32>
    %118 = arith.mulf %116, %117 : vector<1x4x128xf32>
    %cst_40 = arith.constant dense<0.000000e+00> : vector<1x4xf32>
    %119 = vector.multi_reduction <add>, %118, %cst_40 [2] : vector<1x4x128xf32> to vector<1x4xf32>
    %120 = vector.shape_cast %119 : vector<1x4xf32> to vector<1x4x1xf32>
    %cst_41 = arith.constant 6.250000e-02 : f32
    %121 = vector.broadcast %cst_41 : f32 to vector<1x4x1xf32>
    %122 = arith.mulf %120, %121 : vector<1x4x1xf32>
    %cst_42 = arith.constant 9.99999993E-9 : f32
    %123 = vector.broadcast %cst_42 : f32 to vector<1x4x1xf32>
    %124 = arith.addf %120, %123 : vector<1x4x1xf32>
    %cst_43 = arith.constant 1.000000e+00 : f32
    %125 = vector.broadcast %cst_43 : f32 to vector<1x4x1xf32>
    %126 = arith.divf %125, %124 : vector<1x4x1xf32>
    "tpu.trace_start"() <{level = 10 : i32, message = "bkn,bnd->bkd"}> : () -> ()
    %cst_44 = arith.constant dense<0.000000e+00> : vector<1x4x64xf32>
    %127 = tpu.matmul %118, %2, %cst_44 {dimension_numbers = #tpu.dot_dimension_numbers<[2], [1], [1], [2], [0, 0, 0, 1, 1, 2], [0], [0]>} : vector<1x4x128xf32>, vector<1x128x64xf32>, vector<1x4x64xf32> -> vector<1x4x64xf32>
    "tpu.trace_stop"() : () -> ()
    %128 = vector.extract_strided_slice %127 {offsets = [0, 0, 0], sizes = [1, 4, 32], strides = [1, 1, 1]} : vector<1x4x64xf32> to vector<1x4x32xf32>
    %129 = vector.extract_strided_slice %127 {offsets = [0, 0, 32], sizes = [1, 4, 32], strides = [1, 1, 1]} : vector<1x4x64xf32> to vector<1x4x32xf32>
    %130 = vector.broadcast %126 : vector<1x4x1xf32> to vector<1x4x32xf32>
    %131 = arith.mulf %128, %130 : vector<1x4x32xf32>
    %132 = vector.broadcast %126 : vector<1x4x1xf32> to vector<1x4x32xf32>
    %133 = arith.mulf %129, %132 : vector<1x4x32xf32>
    %134 = arith.mulf %131, %131 : vector<1x4x32xf32>
    %135 = arith.mulf %120, %126 : vector<1x4x1xf32>
    %cst_45 = arith.constant 2.000000e+00 : f32
    %136 = vector.broadcast %cst_45 : f32 to vector<1x4x1xf32>
    %137 = arith.subf %136, %135 : vector<1x4x1xf32>
    %138 = vector.broadcast %137 : vector<1x4x1xf32> to vector<1x4x32xf32>
    %139 = arith.mulf %134, %138 : vector<1x4x32xf32>
    %140 = arith.subf %133, %139 : vector<1x4x32xf32>
    %cst_46 = arith.constant 0.000000e+00 : f32
    %141 = vector.broadcast %cst_46 : f32 to vector<1x4x32xf32>
    %142 = arith.maximumf %140, %141 : vector<1x4x32xf32>
    %cst_47 = arith.constant 9.99999993E-9 : f32
    %143 = vector.broadcast %cst_47 : f32 to vector<1x4x32xf32>
    %144 = arith.addf %142, %143 : vector<1x4x32xf32>
    %cst_48 = arith.constant 1.000000e+00 : f32
    %145 = vector.broadcast %cst_48 : f32 to vector<1x4x32xf32>
    %146 = arith.divf %145, %144 : vector<1x4x32xf32>
    %147 = arith.mulf %131, %146 : vector<1x4x32xf32>
    %148 = arith.mulf %131, %147 : vector<1x4x32xf32>
    %cst_49 = arith.constant 6.28318548 : f32
    %149 = vector.broadcast %cst_49 : f32 to vector<1x4x32xf32>
    %150 = arith.mulf %149, %142 : vector<1x4x32xf32>
    %cst_50 = arith.constant 9.99999993E-9 : f32
    %151 = vector.broadcast %cst_50 : f32 to vector<1x4x32xf32>
    %152 = arith.addf %150, %151 : vector<1x4x32xf32>
    %153 = math.log %152 : vector<1x4x32xf32>
    %154 = arith.addf %148, %153 : vector<1x4x32xf32>
    %cst_51 = arith.constant dense<0.000000e+00> : vector<1x4xf32>
    %155 = vector.multi_reduction <add>, %154, %cst_51 [2] : vector<1x4x32xf32> to vector<1x4xf32>
    %156 = vector.shape_cast %155 : vector<1x4xf32> to vector<1x4x1xf32>
    %cst_52 = arith.constant -5.000000e-01 : f32
    %157 = vector.broadcast %cst_52 : f32 to vector<1x4x1xf32>
    %158 = arith.mulf %157, %156 : vector<1x4x1xf32>
    %cst_53 = arith.constant 9.99999993E-9 : f32
    %159 = vector.broadcast %cst_53 : f32 to vector<1x4x1xf32>
    %160 = arith.addf %122, %159 : vector<1x4x1xf32>
    %161 = math.log %160 : vector<1x4x1xf32>
    %162 = arith.addf %158, %161 : vector<1x4x1xf32>
    %cst_54 = arith.constant -5.000000e-01 : f32
    %163 = vector.broadcast %cst_54 : f32 to vector<1x4x32xf32>
    %164 = arith.mulf %163, %146 : vector<1x4x32xf32>
    %165 = tpu.concatenate %147, %164 in 2 : vector<1x4x32xf32>, vector<1x4x32xf32> -> vector<1x4x64xf32>
    "tpu.trace_start"() <{level = 10 : i32, message = "bkd,bnd->bkn"}> : () -> ()
    %cst_55 = arith.constant dense<0.000000e+00> : vector<1x4x128xf32>
    %166 = tpu.matmul %165, %2, %cst_55 {dimension_numbers = #tpu.dot_dimension_numbers<[2], [2], [1], [1], [0, 0, 0, 1, 1, 1], [0], [0]>} : vector<1x4x64xf32>, vector<1x128x64xf32>, vector<1x4x128xf32> -> vector<1x4x128xf32>
    "tpu.trace_stop"() : () -> ()
    %167 = vector.broadcast %162 : vector<1x4x1xf32> to vector<1x4x128xf32>
    %168 = arith.addf %166, %167 : vector<1x4x128xf32>
    %cst_56 = arith.constant dense<0xFF800000> : vector<1x128xf32>
    %169 = vector.multi_reduction <maximumf>, %168, %cst_56 [1] : vector<1x4x128xf32> to vector<1x128xf32>
    %170 = vector.shape_cast %169 : vector<1x128xf32> to vector<1x1x128xf32>
    %171 = vector.broadcast %170 : vector<1x1x128xf32> to vector<1x4x128xf32>
    %172 = arith.subf %168, %171 : vector<1x4x128xf32>
    %173 = math.exp %172 : vector<1x4x128xf32>
    %cst_57 = arith.constant dense<0.000000e+00> : vector<1x128xf32>
    %174 = vector.multi_reduction <add>, %173, %cst_57 [1] : vector<1x4x128xf32> to vector<1x128xf32>
    %175 = vector.shape_cast %174 : vector<1x128xf32> to vector<1x1x128xf32>
    %cst_58 = arith.constant 1.000000e+00 : f32
    %176 = vector.broadcast %cst_58 : f32 to vector<1x1x128xf32>
    %177 = arith.divf %176, %175 : vector<1x1x128xf32>
    %178 = vector.broadcast %177 : vector<1x1x128xf32> to vector<1x4x128xf32>
    %179 = arith.mulf %173, %178 : vector<1x4x128xf32>
    %180 = vector.broadcast %7 : vector<1x1x128xf32> to vector<1x4x128xf32>
    %181 = arith.mulf %179, %180 : vector<1x4x128xf32>
    %cst_59 = arith.constant dense<0.000000e+00> : vector<1x4xf32>
    %182 = vector.multi_reduction <add>, %181, %cst_59 [2] : vector<1x4x128xf32> to vector<1x4xf32>
    %183 = vector.shape_cast %182 : vector<1x4xf32> to vector<1x4x1xf32>
    %cst_60 = arith.constant 9.99999993E-9 : f32
    %184 = vector.broadcast %cst_60 : f32 to vector<1x4x1xf32>
    %185 = arith.addf %183, %184 : vector<1x4x1xf32>
    %cst_61 = arith.constant 1.000000e+00 : f32
    %186 = vector.broadcast %cst_61 : f32 to vector<1x4x1xf32>
    %187 = arith.divf %186, %185 : vector<1x4x1xf32>
    "tpu.trace_start"() <{level = 10 : i32, message = "bkn,bnd->bkd"}> : () -> ()
    %cst_62 = arith.constant dense<0.000000e+00> : vector<1x4x64xf32>
    %188 = tpu.matmul %181, %2, %cst_62 {dimension_numbers = #tpu.dot_dimension_numbers<[2], [1], [1], [2], [0, 0, 0, 1, 1, 2], [0], [0]>} : vector<1x4x128xf32>, vector<1x128x64xf32>, vector<1x4x64xf32> -> vector<1x4x64xf32>
    "tpu.trace_stop"() : () -> ()
    %189 = vector.extract_strided_slice %188 {offsets = [0, 0, 0], sizes = [1, 4, 32], strides = [1, 1, 1]} : vector<1x4x64xf32> to vector<1x4x32xf32>
    %190 = vector.extract_strided_slice %188 {offsets = [0, 0, 32], sizes = [1, 4, 32], strides = [1, 1, 1]} : vector<1x4x64xf32> to vector<1x4x32xf32>
    %191 = vector.broadcast %187 : vector<1x4x1xf32> to vector<1x4x32xf32>
    %192 = arith.mulf %189, %191 : vector<1x4x32xf32>
    %193 = vector.broadcast %187 : vector<1x4x1xf32> to vector<1x4x32xf32>
    %194 = arith.mulf %190, %193 : vector<1x4x32xf32>
    %195 = arith.mulf %192, %192 : vector<1x4x32xf32>
    %196 = arith.mulf %183, %187 : vector<1x4x1xf32>
    %cst_63 = arith.constant 2.000000e+00 : f32
    %197 = vector.broadcast %cst_63 : f32 to vector<1x4x1xf32>
    %198 = arith.subf %197, %196 : vector<1x4x1xf32>
    %199 = vector.broadcast %198 : vector<1x4x1xf32> to vector<1x4x32xf32>
    %200 = arith.mulf %195, %199 : vector<1x4x32xf32>
    %201 = arith.subf %194, %200 : vector<1x4x32xf32>
    %cst_64 = arith.constant 0.000000e+00 : f32
    %202 = vector.broadcast %cst_64 : f32 to vector<1x4x32xf32>
    %203 = arith.maximumf %201, %202 : vector<1x4x32xf32>
    %c0_65 = arith.constant 0 : index
    %c0_66 = arith.constant 0 : index
    %c0_67 = arith.constant 0 : index
    %204 = vector.load %arg5[%c0_65, %c0_66, %c0_67] : memref<1x4x32xf32, #tpu.memory_space<vmem>>, vector<1x4x32xf32>
    %205 = arith.mulf %203, %204 : vector<1x4x32xf32>
    %206 = arith.addf %192, %205 : vector<1x4x32xf32>
    %207 = vector.extract_strided_slice %206 {offsets = [0, 0, 0], sizes = [1, 1, 32], strides = [1, 1, 1]} : vector<1x4x32xf32> to vector<1x1x32xf32>
    %c0_68 = arith.constant 0 : index
    %c0_69 = arith.constant 0 : index
    %c0_70 = arith.constant 0 : index
    %208 = vector.load %arg6[%c0_68, %c0_69, %c0_70] : memref<1x1x128xf32, #tpu.memory_space<vmem>>, vector<1x1x32xf32>
    tpu.vector_store %arg6[%c0_68, %c0_69, %c0_70], %207 {strides = array<i32>} : memref<1x1x128xf32, #tpu.memory_space<vmem>>, vector<1x1x32xf32>,
    %209 = vector.extract_strided_slice %206 {offsets = [0, 1, 0], sizes = [1, 1, 32], strides = [1, 1, 1]} : vector<1x4x32xf32> to vector<1x1x32xf32>
    %c0_71 = arith.constant 0 : index
    %c0_72 = arith.constant 0 : index
    %c32 = arith.constant 32 : index
    %210 = vector.load %arg6[%c0_71, %c0_72, %c32] : memref<1x1x128xf32, #tpu.memory_space<vmem>>, vector<1x1x32xf32>
    tpu.vector_store %arg6[%c0_71, %c0_72, %c32], %209 {strides = array<i32>} : memref<1x1x128xf32, #tpu.memory_space<vmem>>, vector<1x1x32xf32>,
    %211 = vector.extract_strided_slice %206 {offsets = [0, 2, 0], sizes = [1, 1, 32], strides = [1, 1, 1]} : vector<1x4x32xf32> to vector<1x1x32xf32>
    %c0_73 = arith.constant 0 : index
    %c0_74 = arith.constant 0 : index
    %c64 = arith.constant 64 : index
    %212 = vector.load %arg6[%c0_73, %c0_74, %c64] : memref<1x1x128xf32, #tpu.memory_space<vmem>>, vector<1x1x32xf32>
    tpu.vector_store %arg6[%c0_73, %c0_74, %c64], %211 {strides = array<i32>} : memref<1x1x128xf32, #tpu.memory_space<vmem>>, vector<1x1x32xf32>,
    %213 = vector.extract_strided_slice %206 {offsets = [0, 3, 0], sizes = [1, 1, 32], strides = [1, 1, 1]} : vector<1x4x32xf32> to vector<1x1x32xf32>
    %c0_75 = arith.constant 0 : index
    %c0_76 = arith.constant 0 : index
    %c96 = arith.constant 96 : index
    %214 = vector.load %arg6[%c0_75, %c0_76, %c96] : memref<1x1x128xf32, #tpu.memory_space<vmem>>, vector<1x1x32xf32>
    tpu.vector_store %arg6[%c0_75, %c0_76, %c96], %213 {strides = array<i32>} : memref<1x1x128xf32, #tpu.memory_space<vmem>>, vector<1x1x32xf32>,
    return
  }
  func.func @transform_0(%arg0: i32) -> (i32, i32, i32) {
    %c0_i32 = arith.constant 0 : i32
    %c0_i32_0 = arith.constant 0 : i32
    %c0_i32_1 = arith.constant 0 : i32
    return %arg0, %c0_i32, %c0_i32_0 : i32, i32, i32
  }
  func.func @transform_1(%arg0: i32) -> (i32, i32, i32) {
    %c0_i32 = arith.constant 0 : i32
    %c0_i32_0 = arith.constant 0 : i32
    %c0_i32_1 = arith.constant 0 : i32
    %c0_i32_2 = arith.constant 0 : i32
    return %c0_i32, %c0_i32_0, %c0_i32_1 : i32, i32, i32
  }
  func.func @transform_2(%arg0: i32) -> (i32, i32, i32) {
    %c0_i32 = arith.constant 0 : i32
    %c0_i32_0 = arith.constant 0 : i32
    %c0_i32_1 = arith.constant 0 : i32
    %c0_i32_2 = arith.constant 0 : i32
    return %c0_i32, %c0_i32_0, %c0_i32_1 : i32, i32, i32
  }
  func.func @transform_3(%arg0: i32) -> (i32, i32) {
    %c0_i32 = arith.constant 0 : i32
    %c0_i32_0 = arith.constant 0 : i32
    %c0_i32_1 = arith.constant 0 : i32
    return %c0_i32, %c0_i32_0 : i32, i32
  }
  func.func @transform_4(%arg0: i32) -> (i32, i32, i32) {
    %c0_i32 = arith.constant 0 : i32
    %c0_i32_0 = arith.constant 0 : i32
    %c0_i32_1 = arith.constant 0 : i32
    return %arg0, %c0_i32, %c0_i32_0 : i32, i32, i32
  }
  func.func @transform_5(%arg0: i32) -> (i32, i32, i32) {
    %c0_i32 = arith.constant 0 : i32
    %c0_i32_0 = arith.constant 0 : i32
    %c0_i32_1 = arith.constant 0 : i32
    return %arg0, %c0_i32, %c0_i32_0 : i32, i32, i32
  }
}

</mosaic_0001>

<llo_original>
// kernel: tpu_custom_call.1
$region0: #{tpu_custom_call.1}
  #allocation0 [shape = 'u32[]', space=smem, size = 0x4, offset = 0x4, fixed_abs, tag = 'smem constant byte address 0x4 - core index']
  #allocation1 [shape = 'u32[144,128]{1,0:T(1,128)}', space=vmem, size = 0x12000, scoped, tag = 'internal scratch']
  %s0 = inlined_call_operand.vmem [shape: f32[2,128,32], index: 0, kind: input, shape index: {}]
  %s1 = inlined_call_operand.vmem [shape: f32[1,4,32], index: 1, kind: input, shape index: {}]
  %s2 = inlined_call_operand.vmem [shape: f32[1,4,32], index: 2, kind: input, shape index: {}]
  %s3 = inlined_call_operand.vmem [shape: f32[4,1], index: 3, kind: input, shape index: {}]
  %s4 = inlined_call_operand.vmem [shape: f32[2,4,32], index: 4, kind: input, shape index: {}]
  %s5 = inlined_call_operand.hbm [shape: f32[2,1,128], index: 5, kind: output, shape index: {}]
  %s6 = sld [smem:[#allocation0]]
  $region53: #{tpu_custom_call.1} parent=0
    _
  %s8 = ssub.s32 1, %s6
  %s9 = scalar_select 0, %s8, %s6
  $region1: #{tpu_custom_call.1} parent=0
    #allocation2 [shape = 'u8[1024]{0}', space=vmem, size = 0x400, scoped, tag = 'output window, operand 0']
    #allocation3 [shape = 's32[2]{0}', space=sflag, size = 0x8, scoped, tag = 'scoped memory for tpu_custom_call.1']
    %10 = vsyncpa [#allocation3], 0
    %s11 = scalar_lea.sflag [#allocation3], 1
    %12 = vsyncpa %s11, 0
    loop: start=0, step=1, limit=4
    $region2: #{tpu_custom_call.1} parent=1 // loop_pre_header
      _
    $region3: #{tpu_custom_call.1} parent=1 // loop_header
      %s14 = sphi 0, %s18
      %p15 = scmp.ge.s32.totalorder %s14, 4
      %s24 = sphi 0, %s26
      %s27 = sphi 0, %s24
      %s28 = sphi 0, %s27
      %s44 = sphi 0, %s28
      %s48 = sphi 0, %s48
      %s50 = sphi 0, %s48
      %s51 = sphi 0, %s50
      %s65 = sphi 0, %s51
      %s69 = sphi 0, %s69
      %s71 = sphi 0, %s69
      %s72 = sphi 0, %s71
      %s86 = sphi 0, %s72
      %s90 = sphi 0, %s90
      %s92 = sphi 0, %s90
      %s93 = sphi 0, %s92
      %s107 = sphi 0, %s93
      %s113 = sphi 0, %s115
      %s116 = sphi 0, %s113
      %s117 = sphi 0, %s116
      %s133 = sphi 0, %s117
      %s139 = sphi 0, %s141
      %s142 = sphi 0, %s139
      %s143 = sphi 0, %s142
      %s159 = sphi 0, %s143
    $region4: #{tpu_custom_call.1} parent=1 // loop_header_branch
      %17 = sbr.rel (%p15) target = $region8
    $region5: #{tpu_custom_call.1} parent=1 // loop_body
      %s19 = ssub.s32 %s14, 1
      %s20 = ssub.s32 %s14, 2
      %s21 = sadd.s32 %s14, 1
      %s22 = ssub.s32 %s14, %s21
      %p23 = scmp.eq.s32.totalorder %s22, 0
      %s25 = sadd.s32 %s24, 1
      %s26 = scalar_select %p23, %s24, %s25
      %p29 = pneg %p23
      %p30 = scmp.eq.s32.totalorder %s14, 1
      %p31 = por %p29, %p30
      %p32 = scmp.ne.s32.totalorder %s24, %s27
      %p33 = scmp.eq.s32.totalorder %s14, 0
      %p34 = por %p32, %p33
      %p35 = scmp.ne.s32.totalorder %s24, %s27
      %p36 = scmp.eq.s32.totalorder %s19, 1
      %p37 = por %p35, %p36
      %p38 = scmp.ne.s32.totalorder %s27, %s28
      %p39 = scmp.eq.s32.totalorder %s19, 0
      %p40 = por %p38, %p39
      %p41 = scmp.ne.s32.totalorder %s27, %s28
      %p42 = scmp.eq.s32.totalorder %s20, 1
      %p43 = por %p41, %p42
      %p45 = scmp.ne.s32.totalorder %s28, %s44
      %p46 = scmp.eq.s32.totalorder %s20, 0
      %p47 = por %p45, %p46
      %s49 = sadd.s32 %s48, 1
      %p52 = scmp.eq.s32.totalorder %s14, 1
      %p53 = scmp.ne.s32.totalorder %s48, %s50
      %p54 = scmp.eq.s32.totalorder %s14, 0
      %p55 = por %p53, %p54
      %p56 = scmp.ne.s32.totalorder %s48, %s50
      %p57 = scmp.eq.s32.totalorder %s19, 1
      %p58 = por %p56, %p57
      %p59 = scmp.ne.s32.totalorder %s50, %s51
      %p60 = scmp.eq.s32.totalorder %s19, 0
      %p61 = por %p59, %p60
      %p62 = scmp.ne.s32.totalorder %s50, %s51
      %p63 = scmp.eq.s32.totalorder %s20, 1
      %p64 = por %p62, %p63
      %p66 = scmp.ne.s32.totalorder %s51, %s65
      %p67 = scmp.eq.s32.totalorder %s20, 0
      %p68 = por %p66, %p67
      %s70 = sadd.s32 %s69, 1
      %p73 = scmp.eq.s32.totalorder %s14, 1
      %p74 = scmp.ne.s32.totalorder %s69, %s71
      %p75 = scmp.eq.s32.totalorder %s14, 0
      %p76 = por %p74, %p75
      %p77 = scmp.ne.s32.totalorder %s69, %s71
      %p78 = scmp.eq.s32.totalorder %s19, 1
      %p79 = por %p77, %p78
      %p80 = scmp.ne.s32.totalorder %s71, %s72
      %p81 = scmp.eq.s32.totalorder %s19, 0
      %p82 = por %p80, %p81
      %p83 = scmp.ne.s32.totalorder %s71, %s72
      %p84 = scmp.eq.s32.totalorder %s20, 1
      %p85 = por %p83, %p84
      %p87 = scmp.ne.s32.totalorder %s72, %s86
      %p88 = scmp.eq.s32.totalorder %s20, 0
      %p89 = por %p87, %p88
      %s91 = sadd.s32 %s90, 1
      %p94 = scmp.eq.s32.totalorder %s14, 1
      %p95 = scmp.ne.s32.totalorder %s90, %s92
      %p96 = scmp.eq.s32.totalorder %s14, 0
      %p97 = por %p95, %p96
      %p98 = scmp.ne.s32.totalorder %s90, %s92
      %p99 = scmp.eq.s32.totalorder %s19, 1
      %p100 = por %p98, %p99
      %p101 = scmp.ne.s32.totalorder %s92, %s93
      %p102 = scmp.eq.s32.totalorder %s19, 0
      %p103 = por %p101, %p102
      %p104 = scmp.ne.s32.totalorder %s92, %s93
      %p105 = scmp.eq.s32.totalorder %s20, 1
      %p106 = por %p104, %p105
      %p108 = scmp.ne.s32.totalorder %s93, %s107
      %p109 = scmp.eq.s32.totalorder %s20, 0
      %p110 = por %p108, %p109
      %s111 = ssub.s32 %s14, %s21
      %p112 = scmp.eq.s32.totalorder %s111, 0
      %s114 = sadd.s32 %s113, 1
      %s115 = scalar_select %p112, %s113, %s114
      %p118 = pneg %p112
      %p119 = scmp.eq.s32.totalorder %s14, 1
      %p120 = por %p118, %p119
      %p121 = scmp.ne.s32.totalorder %s113, %s116
      %p122 = scmp.eq.s32.totalorder %s14, 0
      %p123 = por %p121, %p122
      %p124 = scmp.ne.s32.totalorder %s113, %s116
      %p125 = scmp.eq.s32.totalorder %s19, 1
      %p126 = por %p124, %p125
      %p127 = scmp.ne.s32.totalorder %s116, %s117
      %p128 = scmp.eq.s32.totalorder %s19, 0
      %p129 = por %p127, %p128
      %p130 = scmp.ne.s32.totalorder %s116, %s117
      %p131 = scmp.eq.s32.totalorder %s20, 1
      %p132 = por %p130, %p131
      %p134 = scmp.ne.s32.totalorder %s117, %s133
      %p135 = scmp.eq.s32.totalorder %s20, 0
      %p136 = por %p134, %p135
      %s137 = ssub.s32 %s14, %s21
      %p138 = scmp.eq.s32.totalorder %s137, 0
      %s140 = sadd.s32 %s139, 1
      %s141 = scalar_select %p138, %s139, %s140
      %p144 = pneg %p138
      %p145 = scmp.eq.s32.totalorder %s14, 1
      %p146 = por %p144, %p145
      %p147 = scmp.ne.s32.totalorder %s139, %s142
      %p148 = scmp.eq.s32.totalorder %s14, 0
      %p149 = por %p147, %p148
      %p150 = scmp.ne.s32.totalorder %s139, %s142
      %p151 = scmp.eq.s32.totalorder %s19, 1
      %p152 = por %p150, %p151
      %p153 = scmp.ne.s32.totalorder %s142, %s143
      %p154 = scmp.eq.s32.totalorder %s19, 0
      %p155 = por %p153, %p154
      %p156 = scmp.ne.s32.totalorder %s142, %s143
      %p157 = scmp.eq.s32.totalorder %s20, 1
      %p158 = por %p156, %p157
      %p160 = scmp.ne.s32.totalorder %s143, %s159
      %p161 = scmp.eq.s32.totalorder %s20, 0
      %p162 = por %p160, %p161
      %p163 = scmp.le.s32.totalorder 1, %s14
      %p164 = scmp.lt.s32.totalorder %s14, 3
      %p165 = pnand %p163, %p164
      %p166 = pneg %p165
      // Predicated region
      $region9: #{tpu_custom_call.1} parent=5 // pred_check
        _
      $region10: #{tpu_custom_call.1} parent=5 // pred_check_branch
        %168 = sbr.rel (%p165) target = $region12
      $region11: #{tpu_custom_call.1} parent=5 // pred_region
        %s169 = ssub.s32 %s14, 1
        // Predicated region
        $region13: #{tpu_custom_call.1} parent=11 // pred_check
          %p170 = pneg %p61
        $region14: #{tpu_custom_call.1} parent=11 // pred_check_branch
          %172 = sbr.rel (%p170) target = $region16
        $region15: #{tpu_custom_call.1} parent=11 // pred_region
          _
        $region16: #{tpu_custom_call.1} parent=11 // pred_fallthru
          _
        // Predicated region
        $region17: #{tpu_custom_call.1} parent=11 // pred_check
          %p173 = pneg %p82
        $region18: #{tpu_custom_call.1} parent=11 // pred_check_branch
          %175 = sbr.rel (%p173) target = $region20
        $region19: #{tpu_custom_call.1} parent=11 // pred_region
          _
        $region20: #{tpu_custom_call.1} parent=11 // pred_fallthru
          _
        // Predicated region
        $region21: #{tpu_custom_call.1} parent=11 // pred_check
          %p176 = pneg %p103
        $region22: #{tpu_custom_call.1} parent=11 // pred_check_branch
          %178 = sbr.rel (%p176) target = $region24
        $region23: #{tpu_custom_call.1} parent=11 // pred_region
          _
        $region24: #{tpu_custom_call.1} parent=11 // pred_fallthru
          _
      $region12: #{tpu_custom_call.1} parent=5 // pred_fallthru
        _
      %p179 = scmp.lt.s32.totalorder %s14, 2
      // Predicated region
      $region25: #{tpu_custom_call.1} parent=5 // pred_check
        %p180 = pneg %p179
      $region26: #{tpu_custom_call.1} parent=5 // pred_check_branch
        %182 = sbr.rel (%p180) target = $region28
      $region27: #{tpu_custom_call.1} parent=5 // pred_region
        // Predicated region
        $region29: #{tpu_custom_call.1} parent=27 // pred_check
          %p183 = pneg %p34
        $region30: #{tpu_custom_call.1} parent=27 // pred_check_branch
          %185 = sbr.rel (%p183) target = $region32
        $region31: #{tpu_custom_call.1} parent=27 // pred_region
          %p186 = scmp.lt.s32.totalorder %s14, 1
          %s187 = scalar_select %p186, %s14, 1
          %s188 = smul.addr %s187, 16
          %s189 = smul.addr %s188, 8
          %s190 = scalar_lea.vmem %s0, %s189
        $region32: #{tpu_custom_call.1} parent=27 // pred_fallthru
          _
        // Predicated region
        $region33: #{tpu_custom_call.1} parent=27 // pred_check
          %p191 = pneg %p123
        $region34: #{tpu_custom_call.1} parent=27 // pred_check_branch
          %193 = sbr.rel (%p191) target = $region36
        $region35: #{tpu_custom_call.1} parent=27 // pred_region
          %p194 = scmp.lt.s32.totalorder %s14, 1
          %s195 = scalar_select %p194, %s14, 1
          %s196 = smul.addr %s195, 4
          %s197 = scalar_lea.vmem %s4, %s196
        $region36: #{tpu_custom_call.1} parent=27 // pred_fallthru
          _
      $region28: #{tpu_custom_call.1} parent=5 // pred_fallthru
        _
      %p198 = scmp.le.s32.totalorder 1, %s14
      %p199 = scmp.lt.s32.totalorder %s14, 3
      %p200 = pnand %p198, %p199
      %p201 = pneg %p200
      // Predicated region
      $region37: #{tpu_custom_call.1} parent=5 // pred_check
        _
      $region38: #{tpu_custom_call.1} parent=5 // pred_check_branch
        %203 = sbr.rel (%p200) target = $region40
      $region39: #{tpu_custom_call.1} parent=5 // pred_region
        %s204 = ssub.s32 %s14, 1
        %p205 = scmp.lt.s32.totalorder %s19, 1
        %s206 = scalar_select %p205, %s19, 1
        %s207 = smul.addr %s206, 16
        %s208 = smul.addr %s207, 8
        %s209 = scalar_lea.vmem %s0, %s208
        %p210 = pneg %p40
        %p211 = pneg %p37
        %p212 = pneg %p61
        %p213 = pneg %p58
        %p214 = pneg %p82
        %p215 = pneg %p79
        %p216 = pneg %p103
        %p217 = pneg %p100
        %p218 = scmp.lt.s32.totalorder %s19, 1
        %s219 = scalar_select %p218, %s19, 1
        %s220 = smul.addr %s219, 4
        %s221 = scalar_lea.vmem %s4, %s220
        %p222 = pneg %p129
        %p223 = pneg %p126
        %p224 = pneg %p155
        %p225 = pneg %p152
        %s226 = sand.u32 %s142, 1
        %s227 = scalar_lea.sflag [#allocation3], %s226
        %s228 = sand.u32 %s142, 1
        %s229 = scalar_lea.vmem [#allocation2], %s228
        %p230 = scmp.lt.s32.totalorder %s19, 1
        %s231 = scalar_select %p230, %s19, 1
        %s232 = smul.addr %s231, 16
        %s233 = smul.addr %s232, 8
        %s234 = scalar_lea.vmem %s0, %s233
        %p235 = scmp.lt.s32.totalorder %s19, 1
        %s236 = scalar_select %p235, %s19, 1
        %s237 = smul.addr %s236, 4
        %s238 = scalar_lea.vmem %s4, %s237
        %v239 = vld [vmem:[%s234] sm:$0xff]
        %v240 = vld [vmem:[%s234 + $0x8] sm:$0xff]
        %v241 = vld [vmem:[%s234 + $0x10] sm:$0xff]
        %v242 = vld [vmem:[%s234 + $0x18] sm:$0xff]
        %v243 = vld [vmem:[%s234 + $0x20] sm:$0xff]
        %v244 = vld [vmem:[%s234 + $0x28] sm:$0xff]
        %v245 = vld [vmem:[%s234 + $0x30] sm:$0xff]
        %v246 = vld [vmem:[%s234 + $0x38] sm:$0xff]
        %v247 = vld [vmem:[%s234 + $0x40] sm:$0xff]
        %v248 = vld [vmem:[%s234 + $0x48] sm:$0xff]
        %v249 = vld [vmem:[%s234 + $0x50] sm:$0xff]
        %v250 = vld [vmem:[%s234 + $0x58] sm:$0xff]
        %v251 = vld [vmem:[%s234 + $0x60] sm:$0xff]
        %v252 = vld [vmem:[%s234 + $0x68] sm:$0xff]
        %v253 = vld [vmem:[%s234 + $0x70] sm:$0xff]
        %v254 = vld [vmem:[%s234 + $0x78] sm:$0xff]
        %v255 = vmul.f32 %v239, %v239
        %v256 = vmul.f32 %v240, %v240
        %v257 = vmul.f32 %v241, %v241
        %v258 = vmul.f32 %v242, %v242
        %v259 = vmul.f32 %v243, %v243
        %v260 = vmul.f32 %v244, %v244
        %v261 = vmul.f32 %v245, %v245
        %v262 = vmul.f32 %v246, %v246
        %v263 = vmul.f32 %v247, %v247
        %v264 = vmul.f32 %v248, %v248
        %v265 = vmul.f32 %v249, %v249
        %v266 = vmul.f32 %v250, %v250
        %v267 = vmul.f32 %v251, %v251
        %v268 = vmul.f32 %v252, %v252
        %v269 = vmul.f32 %v253, %v253
        %v270 = vmul.f32 %v254, %v254
        %287 = vrot.lane.b32.xlu0 %v255, 32
        %v288 = vpop.permute.xlu0 %287
        %289 = vrot.lane.b32.xlu0 %v256, 32
        %v290 = vpop.permute.xlu0 %289
        %291 = vrot.lane.b32.xlu0 %v257, 32
        %v292 = vpop.permute.xlu0 %291
        %293 = vrot.lane.b32.xlu0 %v258, 32
        %v294 = vpop.permute.xlu0 %293
        %295 = vrot.lane.b32.xlu0 %v259, 32
        %v296 = vpop.permute.xlu0 %295
        %297 = vrot.lane.b32.xlu0 %v260, 32
        %v298 = vpop.permute.xlu0 %297
        %299 = vrot.lane.b32.xlu0 %v261, 32
        %v300 = vpop.permute.xlu0 %299
        %301 = vrot.lane.b32.xlu0 %v262, 32
        %v302 = vpop.permute.xlu0 %301
        %303 = vrot.lane.b32.xlu0 %v263, 32
        %v304 = vpop.permute.xlu0 %303
        %305 = vrot.lane.b32.xlu0 %v264, 32
        %v306 = vpop.permute.xlu0 %305
        %307 = vrot.lane.b32.xlu0 %v265, 32
        %v308 = vpop.permute.xlu0 %307
        %309 = vrot.lane.b32.xlu0 %v266, 32
        %v310 = vpop.permute.xlu0 %309
        %311 = vrot.lane.b32.xlu0 %v267, 32
        %v312 = vpop.permute.xlu0 %311
        %313 = vrot.lane.b32.xlu0 %v268, 32
        %v314 = vpop.permute.xlu0 %313
        %315 = vrot.lane.b32.xlu0 %v269, 32
        %v316 = vpop.permute.xlu0 %315
        %317 = vrot.lane.b32.xlu0 %v270, 32
        %v318 = vpop.permute.xlu0 %317
        %vm335 = vcmask 261120
        %v336 = vsel %vm335, %v239, %v288
        %v337 = vsel %vm335, %v240, %v290
        %v338 = vsel %vm335, %v241, %v292
        %v339 = vsel %vm335, %v242, %v294
        %v340 = vsel %vm335, %v243, %v296
        %v341 = vsel %vm335, %v244, %v298
        %v342 = vsel %vm335, %v245, %v300
        %v343 = vsel %vm335, %v246, %v302
        %v344 = vsel %vm335, %v247, %v304
        %v345 = vsel %vm335, %v248, %v306
        %v346 = vsel %vm335, %v249, %v308
        %v347 = vsel %vm335, %v250, %v310
        %v348 = vsel %vm335, %v251, %v312
        %v349 = vsel %vm335, %v252, %v314
        %v350 = vsel %vm335, %v253, %v316
        %v351 = vsel %vm335, %v254, %v318
        %v352 = vlaneseq
        %v353 = vand.u32 %v352, 127
        %vm354 = vcmp.lt.s32.totalorder %v353, 16
        %v355 = vsel %vm354, 1, 0
        %v356 = vcvt.s32.f32 %v355
        %v357 = vld [vmem:[%s1] sm:$0xf]
        %v358 = vld [vmem:[%s2] sm:$0xf]
        %v359 = vmul.f32 %v358, 1.442695
        %v360 = vpow.pop %v359
        %v361 = vld [vmem:[%s3] sm:$0xf]
        %v362 = vadd.f32 %v360, 1e-08
        %v363 = vrcp.pop %v362
        %v364 = vmul.f32 1.0, %v363
        %v365 = vmul.f32 %v357, %v364
        %v366 = vmul.f32 %v357, %v365
        %v367 = vmul.f32 %v360, 6.2831855
        %v368 = vadd.f32 %v367, 1e-08
        %v369 = vlog2.pop %v368
        %v370 = vmul.f32 %v369, 0.6931472
        %v371 = vadd.f32 %v366, %v370
        %vm372 = vcmask 257024
        %v373 = vsel %vm372, %v371, 0.0
        %374 = vadd.xlane.f32.xlu0 %v373
        %v375 = vpop.xlane.xlu0 %374
        %v376 = vmul.f32 %v375, -0.5
        %v377 = vadd.f32 %v361, 1e-08
        %v378 = vlog2.pop %v377
        %v379 = vmul.f32 %v378, 0.6931472
        %v380 = vadd.f32 %v376, %v379
        %v381 = vmul.f32 %v364, -0.5
        %383 = vrot.lane.b32.xlu0 %v381, 32
        %v384 = vpop.permute.xlu0 %383
        %v386 = vsel %vm335, %v365, %v384
        %388 = vset.pattern.permute.xlu0 0
        %389 = vperm.xlu0 %388, %v380
        %v390 = vpop.permute.xlu0 %389
        %vm392 = vcmask 523264
        %v394 = vsel %vm392, %v386, 0
        %v397 = vsel %vm392, %v336, 0
        %v400 = vsel %vm392, %v337, 0
        %v403 = vsel %vm392, %v338, 0
        %v406 = vsel %vm392, %v339, 0
        %v409 = vsel %vm392, %v340, 0
        %v412 = vsel %vm392, %v341, 0
        %v415 = vsel %vm392, %v342, 0
        %v418 = vsel %vm392, %v343, 0
        %v421 = vsel %vm392, %v344, 0
        %v424 = vsel %vm392, %v345, 0
        %v427 = vsel %vm392, %v346, 0
        %v430 = vsel %vm392, %v347, 0
        %v433 = vsel %vm392, %v348, 0
        %v436 = vsel %vm392, %v349, 0
        %v439 = vsel %vm392, %v350, 0
        %v442 = vsel %vm392, %v351, 0
        %444 = vmatprep.subr.mxu0 0.0
        %445 = vmatpush1.xpose.msra.mxu0 %v397
        %446 = vmatprep.subr.mxu0 0.0
        %447 = vmatpush1.xpose.msra.mxu0 %v400
        %448 = vmatprep.subr.mxu0 0.0
        %449 = vmatpush1.xpose.msra.mxu0 %v403
        %450 = vmatprep.subr.mxu0 0.0
        %451 = vmatpush1.xpose.msra.mxu0 %v406
        %452 = vmatprep.subr.mxu0 0.0
        %453 = vmatpush1.xpose.msra.mxu0 %v409
        %454 = vmatprep.subr.mxu0 0.0
        %455 = vmatpush1.xpose.msra.mxu0 %v412
        %456 = vmatprep.subr.mxu0 0.0
        %457 = vmatpush1.xpose.msra.mxu0 %v415
        %458 = vmatprep.subr.mxu0 0.0
        %459 = vmatpush1.xpose.msra.mxu0 %v418
        %460 = vmatprep.subr.mxu0 0.0
        %461 = vmatpush1.xpose.msra.mxu0 %v421
        %462 = vmatprep.subr.mxu0 0.0
        %463 = vmatpush1.xpose.msra.mxu0 %v424
        %464 = vmatprep.subr.mxu0 0.0
        %465 = vmatpush1.xpose.msra.mxu0 %v427
        %466 = vmatprep.subr.mxu0 0.0
        %467 = vmatpush1.xpose.msra.mxu0 %v430
        %468 = vmatprep.subr.mxu0 0.0
        %469 = vmatpush1.xpose.msra.mxu0 %v433
        %470 = vmatprep.subr.mxu0 0.0
        %471 = vmatpush1.xpose.msra.mxu0 %v436
        %472 = vmatprep.subr.mxu0 0.0
        %473 = vmatpush1.xpose.msra.mxu0 %v439
        %474 = vmatprep.subr.mxu0 0.0
        %475 = vmatpush1.xpose.msra.mxu0 %v442
        %476 = vmatprep.subr.mxu0 0.0
        %477 = vmatpush1.xpose.msra.mxu0 0.0
        %478 = vmatprep.subr.mxu0 0.0
        %479 = vmatpush1.xpose.msra.mxu0 0.0
        %480 = vmatprep.subr.mxu0 0.0
        %481 = vmatpush1.xpose.msra.mxu0 0.0
        %482 = vmatprep.subr.mxu0 0.0
        %483 = vmatpush1.xpose.msra.mxu0 0.0
        %484 = vmatprep.subr.mxu0 0.0
        %485 = vmatpush1.xpose.msra.mxu0 0.0
        %486 = vmatprep.subr.mxu0 0.0
        %487 = vmatpush1.xpose.msra.mxu0 0.0
        %488 = vmatprep.subr.mxu0 0.0
        %489 = vmatpush1.xpose.msra.mxu0 0.0
        %490 = vmatprep.subr.mxu0 0.0
        %491 = vmatpush1.xpose.msra.mxu0 0.0
        %492 = vmatprep.subr.mxu0 0.0
        %493 = vmatpush1.xpose.msra.mxu0 0.0
        %494 = vmatprep.subr.mxu0 0.0
        %495 = vmatpush1.xpose.msra.mxu0 0.0
        %496 = vmatprep.subr.mxu0 0.0
        %497 = vmatpush1.xpose.msra.mxu0 0.0
        %498 = vmatprep.subr.mxu0 0.0
        %499 = vmatpush1.xpose.msra.mxu0 0.0
        %500 = vmatprep.subr.mxu0 0.0
        %501 = vmatpush1.xpose.msra.mxu0 0.0
        %502 = vmatprep.subr.mxu0 0.0
        %503 = vmatpush1.xpose.msra.mxu0 0.0
        %504 = vmatprep.subr.mxu0 0.0
        %505 = vmatpush1.xpose.msra.mxu0 0.0
        %506 = vmatprep.subr.mxu0 0.0
        %507 = vmatpush1.xpose.msra.mxu0 0.0
        %508 = vmatprep.mubr.f32.mxu0 0.0
        %509 = vmatmul.mubr.f32.gmra.mrb[0].mxu0 %v394
        %v510 = vpop.f32.mrb[0].mxu0
        %v511 = vadd.f32 %v390, %v510
        %v512 = vpop.f32.mrb[0].mxu0
        %513 = vdwg.mxu0
        %vm514 = vcmask 1043456
        %v515 = vsel %vm514, %v511, -inf
        %v516 = vrot.slane %v515, 4
        %v517 = vmax.f32 %v515, %v516
        %v518 = vrot.slane %v517, 2
        %v519 = vmax.f32 %v517, %v518
        %v520 = vrot.slane %v519, 1
        %v521 = vmax.f32 %v519, %v520
        %v522 = vsub.f32 %v511, %v521
        %v523 = vmul.f32 %v522, 1.442695
        %v524 = vpow.pop %v523
        %v525 = vsel %vm514, %v524, 0.0
        %v526 = vrot.slane %v525, 4
        %v527 = vadd.f32 %v525, %v526
        %v528 = vrot.slane %v527, 2
        %v529 = vadd.f32 %v527, %v528
        %v530 = vrot.slane %v529, 1
        %v531 = vadd.f32 %v529, %v530
        %v532 = vrcp.pop %v531
        %v533 = vmul.f32 1.0, %v532
        %v534 = vmul.f32 %v524, %v533
        %v535 = vmul.f32 %v534, %v356
        %v536 = vsel %vm514, %v535, 0.0
        %537 = vadd.xlane.f32.xlu0 %v536
        %v538 = vpop.xlane.xlu0 %537
        %v539 = vmul.f32 %v538, 0.0625
        %v540 = vadd.f32 %v538, 1e-08
        %v541 = vrcp.pop %v540
        %v542 = vmul.f32 1.0, %v541
        %543 = vmatprep.subr.mxu0 0.0
        %544 = vmatpush1.msra.mxu0 %v336
        %545 = vmatprep.subr.mxu0 0.0
        %546 = vmatpush1.msra.mxu0 %v337
        %547 = vmatprep.subr.mxu0 0.0
        %548 = vmatpush1.msra.mxu0 %v338
        %549 = vmatprep.subr.mxu0 0.0
        %550 = vmatpush1.msra.mxu0 %v339
        %551 = vmatprep.subr.mxu0 0.0
        %552 = vmatpush1.msra.mxu0 %v340
        %553 = vmatprep.subr.mxu0 0.0
        %554 = vmatpush1.msra.mxu0 %v341
        %555 = vmatprep.subr.mxu0 0.0
        %556 = vmatpush1.msra.mxu0 %v342
        %557 = vmatprep.subr.mxu0 0.0
        %558 = vmatpush1.msra.mxu0 %v343
        %559 = vmatprep.subr.mxu0 0.0
        %560 = vmatpush1.msra.mxu0 %v344
        %561 = vmatprep.subr.mxu0 0.0
        %562 = vmatpush1.msra.mxu0 %v345
        %563 = vmatprep.subr.mxu0 0.0
        %564 = vmatpush1.msra.mxu0 %v346
        %565 = vmatprep.subr.mxu0 0.0
        %566 = vmatpush1.msra.mxu0 %v347
        %567 = vmatprep.subr.mxu0 0.0
        %568 = vmatpush1.msra.mxu0 %v348
        %569 = vmatprep.subr.mxu0 0.0
        %570 = vmatpush1.msra.mxu0 %v349
        %571 = vmatprep.subr.mxu0 0.0
        %572 = vmatpush1.msra.mxu0 %v350
        %573 = vmatprep.subr.mxu0 0.0
        %574 = vmatpush1.msra.mxu0 %v351
        %575 = vmatprep.subr.mxu0 0.0
        %576 = vmatpush1.msra.mxu0 0.0
        %577 = vmatprep.subr.mxu0 0.0
        %578 = vmatpush1.msra.mxu0 0.0
        %579 = vmatprep.subr.mxu0 0.0
        %580 = vmatpush1.msra.mxu0 0.0
        %581 = vmatprep.subr.mxu0 0.0
        %582 = vmatpush1.msra.mxu0 0.0
        %583 = vmatprep.subr.mxu0 0.0
        %584 = vmatpush1.msra.mxu0 0.0
        %585 = vmatprep.subr.mxu0 0.0
        %586 = vmatpush1.msra.mxu0 0.0
        %587 = vmatprep.subr.mxu0 0.0
        %588 = vmatpush1.msra.mxu0 0.0
        %589 = vmatprep.subr.mxu0 0.0
        %590 = vmatpush1.msra.mxu0 0.0
        %591 = vmatprep.subr.mxu0 0.0
        %592 = vmatpush1.msra.mxu0 0.0
        %593 = vmatprep.subr.mxu0 0.0
        %594 = vmatpush1.msra.mxu0 0.0
        %595 = vmatprep.subr.mxu0 0.0
        %596 = vmatpush1.msra.mxu0 0.0
        %597 = vmatprep.subr.mxu0 0.0
        %598 = vmatpush1.msra.mxu0 0.0
        %599 = vmatprep.subr.mxu0 0.0
        %600 = vmatpush1.msra.mxu0 0.0
        %601 = vmatprep.subr.mxu0 0.0
        %602 = vmatpush1.msra.mxu0 0.0
        %603 = vmatprep.subr.mxu0 0.0
        %604 = vmatpush1.msra.mxu0 0.0
        %605 = vmatprep.subr.mxu0 0.0
        %606 = vmatpush1.msra.mxu0 0.0
        %607 = vmatprep.mubr.f32.mxu0 0.0
        %608 = vmatmul.mubr.f32.gmra.mrb[0].mxu0 %v535
        %v609 = vpop.f32.mrb[0].mxu0
        %v610 = vadd.f32 0.0, %v609
        %v611 = vpop.f32.mrb[0].mxu0
        %612 = vdwg.mxu0
        %v613 = vmul.f32 %v610, %v542
        %v614 = vmul.f32 %v613, %v613
        %v615 = vmul.f32 %v538, %v542
        %v616 = vsub.f32 2.0, %v615
        %v617 = vmul.f32 %v614, %v616
        %619 = vrot.lane.b32.xlu0 %v617, 32
        %v620 = vpop.permute.xlu0 %619
        %v622 = vsub.f32 %v613, %v620
        %v623 = vmax.f32 %v622, 0.0
        %v624 = vadd.f32 %v623, 1e-08
        %v625 = vrcp.pop %v624
        %v626 = vmul.f32 1.0, %v625
        %628 = vrot.lane.b32.xlu0 %v626, 96
        %v629 = vpop.permute.xlu0 %628
        %v631 = vmul.f32 %v613, %v629
        %v632 = vmul.f32 %v613, %v631
        %v633 = vmul.f32 %v623, 6.2831855
        %v634 = vadd.f32 %v633, 1e-08
        %v635 = vlog2.pop %v634
        %v636 = vmul.f32 %v635, 0.6931472
        %638 = vrot.lane.b32.xlu0 %v636, 96
        %v639 = vpop.permute.xlu0 %638
        %v641 = vadd.f32 %v632, %v639
        %v642 = vsel %vm372, %v641, 0.0
        %643 = vadd.xlane.f32.xlu0 %v642
        %v644 = vpop.xlane.xlu0 %643
        %v645 = vmul.f32 %v644, -0.5
        %v646 = vadd.f32 %v539, 1e-08
        %v647 = vlog2.pop %v646
        %v648 = vmul.f32 %v647, 0.6931472
        %v649 = vadd.f32 %v645, %v648
        %v650 = vmul.f32 %v626, -0.5
        %v651 = vsel %vm335, %v631, %v650
        %v653 = vsel %vm392, %v651, 0
        %655 = vmatprep.subr.mxu0 0.0
        %656 = vmatpush1.xpose.msra.mxu0 %v397
        %657 = vmatprep.subr.mxu0 0.0
        %658 = vmatpush1.xpose.msra.mxu0 %v400
        %659 = vmatprep.subr.mxu0 0.0
        %660 = vmatpush1.xpose.msra.mxu0 %v403
        %661 = vmatprep.subr.mxu0 0.0
        %662 = vmatpush1.xpose.msra.mxu0 %v406
        %663 = vmatprep.subr.mxu0 0.0
        %664 = vmatpush1.xpose.msra.mxu0 %v409
        %665 = vmatprep.subr.mxu0 0.0
        %666 = vmatpush1.xpose.msra.mxu0 %v412
        %667 = vmatprep.subr.mxu0 0.0
        %668 = vmatpush1.xpose.msra.mxu0 %v415
        %669 = vmatprep.subr.mxu0 0.0
        %670 = vmatpush1.xpose.msra.mxu0 %v418
        %671 = vmatprep.subr.mxu0 0.0
        %672 = vmatpush1.xpose.msra.mxu0 %v421
        %673 = vmatprep.subr.mxu0 0.0
        %674 = vmatpush1.xpose.msra.mxu0 %v424
        %675 = vmatprep.subr.mxu0 0.0
        %676 = vmatpush1.xpose.msra.mxu0 %v427
        %677 = vmatprep.subr.mxu0 0.0
        %678 = vmatpush1.xpose.msra.mxu0 %v430
        %679 = vmatprep.subr.mxu0 0.0
        %680 = vmatpush1.xpose.msra.mxu0 %v433
        %681 = vmatprep.subr.mxu0 0.0
        %682 = vmatpush1.xpose.msra.mxu0 %v436
        %683 = vmatprep.subr.mxu0 0.0
        %684 = vmatpush1.xpose.msra.mxu0 %v439
        %685 = vmatprep.subr.mxu0 0.0
        %686 = vmatpush1.xpose.msra.mxu0 %v442
        %687 = vmatprep.subr.mxu0 0.0
        %688 = vmatpush1.xpose.msra.mxu0 0.0
        %689 = vmatprep.subr.mxu0 0.0
        %690 = vmatpush1.xpose.msra.mxu0 0.0
        %691 = vmatprep.subr.mxu0 0.0
        %692 = vmatpush1.xpose.msra.mxu0 0.0
        %693 = vmatprep.subr.mxu0 0.0
        %694 = vmatpush1.xpose.msra.mxu0 0.0
        %695 = vmatprep.subr.mxu0 0.0
        %696 = vmatpush1.xpose.msra.mxu0 0.0
        %697 = vmatprep.subr.mxu0 0.0
        %698 = vmatpush1.xpose.msra.mxu0 0.0
        %699 = vmatprep.subr.mxu0 0.0
        %700 = vmatpush1.xpose.msra.mxu0 0.0
        %701 = vmatprep.subr.mxu0 0.0
        %702 = vmatpush1.xpose.msra.mxu0 0.0
        %703 = vmatprep.subr.mxu0 0.0
        %704 = vmatpush1.xpose.msra.mxu0 0.0
        %705 = vmatprep.subr.mxu0 0.0
        %706 = vmatpush1.xpose.msra.mxu0 0.0
        %707 = vmatprep.subr.mxu0 0.0
        %708 = vmatpush1.xpose.msra.mxu0 0.0
        %709 = vmatprep.subr.mxu0 0.0
        %710 = vmatpush1.xpose.msra.mxu0 0.0
        %711 = vmatprep.subr.mxu0 0.0
        %712 = vmatpush1.xpose.msra.mxu0 0.0
        %713 = vmatprep.subr.mxu0 0.0
        %714 = vmatpush1.xpose.msra.mxu0 0.0
        %715 = vmatprep.subr.mxu0 0.0
        %716 = vmatpush1.xpose.msra.mxu0 0.0
        %717 = vmatprep.subr.mxu0 0.0
        %718 = vmatpush1.xpose.msra.mxu0 0.0
        %719 = vmatprep.mubr.f32.mxu0 0.0
        %720 = vmatmul.mubr.f32.gmra.mrb[0].mxu0 %v653
        %v721 = vpop.f32.mrb[0].mxu0
        %v722 = vadd.f32 %v649, %v721
        %v723 = vpop.f32.mrb[0].mxu0
        %724 = vdwg.mxu0
        %v725 = vsel %vm514, %v722, -inf
        %v726 = vrot.slane %v725, 4
        %v727 = vmax.f32 %v725, %v726
        %v728 = vrot.slane %v727, 2
        %v729 = vmax.f32 %v727, %v728
        %v730 = vrot.slane %v729, 1
        %v731 = vmax.f32 %v729, %v730
        %v732 = vsub.f32 %v722, %v731
        %v733 = vmul.f32 %v732, 1.442695
        %v734 = vpow.pop %v733
        %v735 = vsel %vm514, %v734, 0.0
        %v736 = vrot.slane %v735, 4
        %v737 = vadd.f32 %v735, %v736
        %v738 = vrot.slane %v737, 2
        %v739 = vadd.f32 %v737, %v738
        %v740 = vrot.slane %v739, 1
        %v741 = vadd.f32 %v739, %v740
        %v742 = vrcp.pop %v741
        %v743 = vmul.f32 1.0, %v742
        %v744 = vmul.f32 %v734, %v743
        %v745 = vmul.f32 %v744, %v356
        %v746 = vsel %vm514, %v745, 0.0
        %747 = vadd.xlane.f32.xlu0 %v746
        %v748 = vpop.xlane.xlu0 %747
        %v749 = vmul.f32 %v748, 0.0625
        %v750 = vadd.f32 %v748, 1e-08
        %v751 = vrcp.pop %v750
        %v752 = vmul.f32 1.0, %v751
        %753 = vmatprep.subr.mxu0 0.0
        %754 = vmatpush1.msra.mxu0 %v336
        %755 = vmatprep.subr.mxu0 0.0
        %756 = vmatpush1.msra.mxu0 %v337
        %757 = vmatprep.subr.mxu0 0.0
        %758 = vmatpush1.msra.mxu0 %v338
        %759 = vmatprep.subr.mxu0 0.0
        %760 = vmatpush1.msra.mxu0 %v339
        %761 = vmatprep.subr.mxu0 0.0
        %762 = vmatpush1.msra.mxu0 %v340
        %763 = vmatprep.subr.mxu0 0.0
        %764 = vmatpush1.msra.mxu0 %v341
        %765 = vmatprep.subr.mxu0 0.0
        %766 = vmatpush1.msra.mxu0 %v342
        %767 = vmatprep.subr.mxu0 0.0
        %768 = vmatpush1.msra.mxu0 %v343
        %769 = vmatprep.subr.mxu0 0.0
        %770 = vmatpush1.msra.mxu0 %v344
        %771 = vmatprep.subr.mxu0 0.0
        %772 = vmatpush1.msra.mxu0 %v345
        %773 = vmatprep.subr.mxu0 0.0
        %774 = vmatpush1.msra.mxu0 %v346
        %775 = vmatprep.subr.mxu0 0.0
        %776 = vmatpush1.msra.mxu0 %v347
        %777 = vmatprep.subr.mxu0 0.0
        %778 = vmatpush1.msra.mxu0 %v348
        %779 = vmatprep.subr.mxu0 0.0
        %780 = vmatpush1.msra.mxu0 %v349
        %781 = vmatprep.subr.mxu0 0.0
        %782 = vmatpush1.msra.mxu0 %v350
        %783 = vmatprep.subr.mxu0 0.0
        %784 = vmatpush1.msra.mxu0 %v351
        %785 = vmatprep.subr.mxu0 0.0
        %786 = vmatpush1.msra.mxu0 0.0
        %787 = vmatprep.subr.mxu0 0.0
        %788 = vmatpush1.msra.mxu0 0.0
        %789 = vmatprep.subr.mxu0 0.0
        %790 = vmatpush1.msra.mxu0 0.0
        %791 = vmatprep.subr.mxu0 0.0
        %792 = vmatpush1.msra.mxu0 0.0
        %793 = vmatprep.subr.mxu0 0.0
        %794 = vmatpush1.msra.mxu0 0.0
        %795 = vmatprep.subr.mxu0 0.0
        %796 = vmatpush1.msra.mxu0 0.0
        %797 = vmatprep.subr.mxu0 0.0
        %798 = vmatpush1.msra.mxu0 0.0
        %799 = vmatprep.subr.mxu0 0.0
        %800 = vmatpush1.msra.mxu0 0.0
        %801 = vmatprep.subr.mxu0 0.0
        %802 = vmatpush1.msra.mxu0 0.0
        %803 = vmatprep.subr.mxu0 0.0
        %804 = vmatpush1.msra.mxu0 0.0
        %805 = vmatprep.subr.mxu0 0.0
        %806 = vmatpush1.msra.mxu0 0.0
        %807 = vmatprep.subr.mxu0 0.0
        %808 = vmatpush1.msra.mxu0 0.0
        %809 = vmatprep.subr.mxu0 0.0
        %810 = vmatpush1.msra.mxu0 0.0
        %811 = vmatprep.subr.mxu0 0.0
        %812 = vmatpush1.msra.mxu0 0.0
        %813 = vmatprep.subr.mxu0 0.0
        %814 = vmatpush1.msra.mxu0 0.0
        %815 = vmatprep.subr.mxu0 0.0
        %816 = vmatpush1.msra.mxu0 0.0
        %817 = vmatprep.mubr.f32.mxu0 0.0
        %818 = vmatmul.mubr.f32.gmra.mrb[0].mxu0 %v745
        %v819 = vpop.f32.mrb[0].mxu0
        %v820 = vadd.f32 0.0, %v819
        %v821 = vpop.f32.mrb[0].mxu0
        %822 = vdwg.mxu0
        %v823 = vmul.f32 %v820, %v752
        %v824 = vmul.f32 %v823, %v823
        %v825 = vmul.f32 %v748, %v752
        %v826 = vsub.f32 2.0, %v825
        %v827 = vmul.f32 %v824, %v826
        %829 = vrot.lane.b32.xlu0 %v827, 32
        %v830 = vpop.permute.xlu0 %829
        %v832 = vsub.f32 %v823, %v830
        %v833 = vmax.f32 %v832, 0.0
        %v834 = vadd.f32 %v833, 1e-08
        %v835 = vrcp.pop %v834
        %v836 = vmul.f32 1.0, %v835
        %838 = vrot.lane.b32.xlu0 %v836, 96
        %v839 = vpop.permute.xlu0 %838
        %v841 = vmul.f32 %v823, %v839
        %v842 = vmul.f32 %v823, %v841
        %v843 = vmul.f32 %v833, 6.2831855
        %v844 = vadd.f32 %v843, 1e-08
        %v845 = vlog2.pop %v844
        %v846 = vmul.f32 %v845, 0.6931472
        %848 = vrot.lane.b32.xlu0 %v846, 96
        %v849 = vpop.permute.xlu0 %848
        %v851 = vadd.f32 %v842, %v849
        %v852 = vsel %vm372, %v851, 0.0
        %853 = vadd.xlane.f32.xlu0 %v852
        %v854 = vpop.xlane.xlu0 %853
        %v855 = vmul.f32 %v854, -0.5
        %v856 = vadd.f32 %v749, 1e-08
        %v857 = vlog2.pop %v856
        %v858 = vmul.f32 %v857, 0.6931472
        %v859 = vadd.f32 %v855, %v858
        %v860 = vmul.f32 %v836, -0.5
        %v861 = vsel %vm335, %v841, %v860
        %v863 = vsel %vm392, %v861, 0
        %865 = vmatprep.subr.mxu0 0.0
        %866 = vmatpush1.xpose.msra.mxu0 %v397
        %867 = vmatprep.subr.mxu0 0.0
        %868 = vmatpush1.xpose.msra.mxu0 %v400
        %869 = vmatprep.subr.mxu0 0.0
        %870 = vmatpush1.xpose.msra.mxu0 %v403
        %871 = vmatprep.subr.mxu0 0.0
        %872 = vmatpush1.xpose.msra.mxu0 %v406
        %873 = vmatprep.subr.mxu0 0.0
        %874 = vmatpush1.xpose.msra.mxu0 %v409
        %875 = vmatprep.subr.mxu0 0.0
        %876 = vmatpush1.xpose.msra.mxu0 %v412
        %877 = vmatprep.subr.mxu0 0.0
        %878 = vmatpush1.xpose.msra.mxu0 %v415
        %879 = vmatprep.subr.mxu0 0.0
        %880 = vmatpush1.xpose.msra.mxu0 %v418
        %881 = vmatprep.subr.mxu0 0.0
        %882 = vmatpush1.xpose.msra.mxu0 %v421
        %883 = vmatprep.subr.mxu0 0.0
        %884 = vmatpush1.xpose.msra.mxu0 %v424
        %885 = vmatprep.subr.mxu0 0.0
        %886 = vmatpush1.xpose.msra.mxu0 %v427
        %887 = vmatprep.subr.mxu0 0.0
        %888 = vmatpush1.xpose.msra.mxu0 %v430
        %889 = vmatprep.subr.mxu0 0.0
        %890 = vmatpush1.xpose.msra.mxu0 %v433
        %891 = vmatprep.subr.mxu0 0.0
        %892 = vmatpush1.xpose.msra.mxu0 %v436
        %893 = vmatprep.subr.mxu0 0.0
        %894 = vmatpush1.xpose.msra.mxu0 %v439
        %895 = vmatprep.subr.mxu0 0.0
        %896 = vmatpush1.xpose.msra.mxu0 %v442
        %897 = vmatprep.subr.mxu0 0.0
        %898 = vmatpush1.xpose.msra.mxu0 0.0
        %899 = vmatprep.subr.mxu0 0.0
        %900 = vmatpush1.xpose.msra.mxu0 0.0
        %901 = vmatprep.subr.mxu0 0.0
        %902 = vmatpush1.xpose.msra.mxu0 0.0
        %903 = vmatprep.subr.mxu0 0.0
        %904 = vmatpush1.xpose.msra.mxu0 0.0
        %905 = vmatprep.subr.mxu0 0.0
        %906 = vmatpush1.xpose.msra.mxu0 0.0
        %907 = vmatprep.subr.mxu0 0.0
        %908 = vmatpush1.xpose.msra.mxu0 0.0
        %909 = vmatprep.subr.mxu0 0.0
        %910 = vmatpush1.xpose.msra.mxu0 0.0
        %911 = vmatprep.subr.mxu0 0.0
        %912 = vmatpush1.xpose.msra.mxu0 0.0
        %913 = vmatprep.subr.mxu0 0.0
        %914 = vmatpush1.xpose.msra.mxu0 0.0
        %915 = vmatprep.subr.mxu0 0.0
        %916 = vmatpush1.xpose.msra.mxu0 0.0
        %917 = vmatprep.subr.mxu0 0.0
        %918 = vmatpush1.xpose.msra.mxu0 0.0
        %919 = vmatprep.subr.mxu0 0.0
        %920 = vmatpush1.xpose.msra.mxu0 0.0
        %921 = vmatprep.subr.mxu0 0.0
        %922 = vmatpush1.xpose.msra.mxu0 0.0
        %923 = vmatprep.subr.mxu0 0.0
        %924 = vmatpush1.xpose.msra.mxu0 0.0
        %925 = vmatprep.subr.mxu0 0.0
        %926 = vmatpush1.xpose.msra.mxu0 0.0
        %927 = vmatprep.subr.mxu0 0.0
        %928 = vmatpush1.xpose.msra.mxu0 0.0
        %929 = vmatprep.mubr.f32.mxu0 0.0
        %930 = vmatmul.mubr.f32.gmra.mrb[0].mxu0 %v863
        %v931 = vpop.f32.mrb[0].mxu0
        %v932 = vadd.f32 %v859, %v931
        %v933 = vpop.f32.mrb[0].mxu0
        %934 = vdwg.mxu0
        %v935 = vsel %vm514, %v932, -inf
        %v936 = vrot.slane %v935, 4
        %v937 = vmax.f32 %v935, %v936
        %v938 = vrot.slane %v937, 2
        %v939 = vmax.f32 %v937, %v938
        %v940 = vrot.slane %v939, 1
        %v941 = vmax.f32 %v939, %v940
        %v942 = vsub.f32 %v932, %v941
        %v943 = vmul.f32 %v942, 1.442695
        %v944 = vpow.pop %v943
        %v945 = vsel %vm514, %v944, 0.0
        %v946 = vrot.slane %v945, 4
        %v947 = vadd.f32 %v945, %v946
        %v948 = vrot.slane %v947, 2
        %v949 = vadd.f32 %v947, %v948
        %v950 = vrot.slane %v949, 1
        %v951 = vadd.f32 %v949, %v950
        %v952 = vrcp.pop %v951
        %v953 = vmul.f32 1.0, %v952
        %v954 = vmul.f32 %v944, %v953
        %v955 = vmul.f32 %v954, %v356
        %v956 = vsel %vm514, %v955, 0.0
        %957 = vadd.xlane.f32.xlu0 %v956
        %v958 = vpop.xlane.xlu0 %957
        %v959 = vadd.f32 %v958, 1e-08
        %v960 = vrcp.pop %v959
        %v961 = vmul.f32 1.0, %v960
        %962 = vmatprep.subr.mxu0 0.0
        %963 = vmatpush1.msra.mxu0 %v336
        %964 = vmatprep.subr.mxu0 0.0
        %965 = vmatpush1.msra.mxu0 %v337
        %966 = vmatprep.subr.mxu0 0.0
        %967 = vmatpush1.msra.mxu0 %v338
        %968 = vmatprep.subr.mxu0 0.0
        %969 = vmatpush1.msra.mxu0 %v339
        %970 = vmatprep.subr.mxu0 0.0
        %971 = vmatpush1.msra.mxu0 %v340
        %972 = vmatprep.subr.mxu0 0.0
        %973 = vmatpush1.msra.mxu0 %v341
        %974 = vmatprep.subr.mxu0 0.0
        %975 = vmatpush1.msra.mxu0 %v342
        %976 = vmatprep.subr.mxu0 0.0
        %977 = vmatpush1.msra.mxu0 %v343
        %978 = vmatprep.subr.mxu0 0.0
        %979 = vmatpush1.msra.mxu0 %v344
        %980 = vmatprep.subr.mxu0 0.0
        %981 = vmatpush1.msra.mxu0 %v345
        %982 = vmatprep.subr.mxu0 0.0
        %983 = vmatpush1.msra.mxu0 %v346
        %984 = vmatprep.subr.mxu0 0.0
        %985 = vmatpush1.msra.mxu0 %v347
        %986 = vmatprep.subr.mxu0 0.0
        %987 = vmatpush1.msra.mxu0 %v348
        %988 = vmatprep.subr.mxu0 0.0
        %989 = vmatpush1.msra.mxu0 %v349
        %990 = vmatprep.subr.mxu0 0.0
        %991 = vmatpush1.msra.mxu0 %v350
        %992 = vmatprep.subr.mxu0 0.0
        %993 = vmatpush1.msra.mxu0 %v351
        %994 = vmatprep.subr.mxu0 0.0
        %995 = vmatpush1.msra.mxu0 0.0
        %996 = vmatprep.subr.mxu0 0.0
        %997 = vmatpush1.msra.mxu0 0.0
        %998 = vmatprep.subr.mxu0 0.0
        %999 = vmatpush1.msra.mxu0 0.0
        %1000 = vmatprep.subr.mxu0 0.0
        %1001 = vmatpush1.msra.mxu0 0.0
        %1002 = vmatprep.subr.mxu0 0.0
        %1003 = vmatpush1.msra.mxu0 0.0
        %1004 = vmatprep.subr.mxu0 0.0
        %1005 = vmatpush1.msra.mxu0 0.0
        %1006 = vmatprep.subr.mxu0 0.0
        %1007 = vmatpush1.msra.mxu0 0.0
        %1008 = vmatprep.subr.mxu0 0.0
        %1009 = vmatpush1.msra.mxu0 0.0
        %1010 = vmatprep.subr.mxu0 0.0
        %1011 = vmatpush1.msra.mxu0 0.0
        %1012 = vmatprep.subr.mxu0 0.0
        %1013 = vmatpush1.msra.mxu0 0.0
        %1014 = vmatprep.subr.mxu0 0.0
        %1015 = vmatpush1.msra.mxu0 0.0
        %1016 = vmatprep.subr.mxu0 0.0
        %1017 = vmatpush1.msra.mxu0 0.0
        %1018 = vmatprep.subr.mxu0 0.0
        %1019 = vmatpush1.msra.mxu0 0.0
        %1020 = vmatprep.subr.mxu0 0.0
        %1021 = vmatpush1.msra.mxu0 0.0
        %1022 = vmatprep.subr.mxu0 0.0
        %1023 = vmatpush1.msra.mxu0 0.0
        %1024 = vmatprep.subr.mxu0 0.0
        %1025 = vmatpush1.msra.mxu0 0.0
        %1026 = vmatprep.mubr.f32.mxu0 0.0
        %1027 = vmatmul.mubr.f32.gmra.mrb[0].mxu0 %v955
        %v1028 = vpop.f32.mrb[0].mxu0
        %v1029 = vadd.f32 0.0, %v1028
        %v1030 = vpop.f32.mrb[0].mxu0
        %1031 = vdwg.mxu0
        %v1032 = vmul.f32 %v1029, %v961
        %v1033 = vmul.f32 %v1032, %v1032
        %v1034 = vmul.f32 %v958, %v961
        %v1035 = vsub.f32 2.0, %v1034
        %v1036 = vmul.f32 %v1033, %v1035
        %1038 = vrot.lane.b32.xlu0 %v1036, 32
        %v1039 = vpop.permute.xlu0 %1038
        %v1041 = vsub.f32 %v1032, %v1039
        %v1042 = vmax.f32 %v1041, 0.0
        %v1043 = vld [vmem:[%s238] sm:$0xf]
        %1045 = vrot.lane.b32.xlu0 %v1043, 32
        %v1046 = vpop.permute.xlu0 %1045
        %v1048 = vmul.f32 %v1042, %v1046
        %1050 = vrot.lane.b32.xlu0 %v1048, 96
        %v1051 = vpop.permute.xlu0 %1050
        %v1053 = vadd.f32 %v1032, %v1051
        %vm1054 = vcmask 253952
        %1055 = vst.msk [vmem:[%s229] sm:$0x1] %vm1054, %v1053
        %1057 = vrot.lane.b32.xlu0 %v1053, 32
        %v1058 = vpop.permute.xlu0 %1057
        %vm1060 = vcmask 517377
        %1061 = vst.msk [vmem:[%s229 - $0x1] sm:$0x2] %vm1060, %v1058
        %1062 = vrot.lane.b32.xlu0 %v1053, 64
        %v1063 = vpop.permute.xlu0 %1062
        %vm1065 = vcmask 780802
        %1066 = vst.msk [vmem:[%s229 - $0x2] sm:$0x4] %vm1065, %v1063
        %1067 = vrot.lane.b32.xlu0 %v1053, 96
        %v1068 = vpop.permute.xlu0 %1067
        %vm1070 = vcmask 1044227
        %1071 = vst.msk [vmem:[%s229 - $0x3] sm:$0x8] %vm1070, %v1068
        %s1072 = sand.u32 %s142, 1
        %s1073 = scalar_lea.sflag [#allocation3], %s1072
        %s1074 = sand.u32 %s142, 1
        %s1075 = scalar_lea.vmem [#allocation2], %s1074
        // Predicated region
        $region41: #{tpu_custom_call.1} parent=39 // pred_check
          %p1076 = pneg %p152
        $region42: #{tpu_custom_call.1} parent=39 // pred_check_branch
          %1078 = sbr.rel (%p1076) target = $region44
        $region43: #{tpu_custom_call.1} parent=39 // pred_region
          %s1080 = ssub.s32 16, 16
          %1081 = vsyncadd %s1073, %s1080
          %s1082 = smul.addr %s19, 16
          %s1083 = scalar_lea.hbm %s5, %s1082
          %s1085 = sshll.u32 %s1075, 4
          %s1086 = int_to_ptr.vmem [resolvable:$true] %s1085
          %1088 = dma.vmem_to_hbm [thread:$0]  %s1086, 16, %s1083, %s1073
        $region44: #{tpu_custom_call.1} parent=39 // pred_fallthru
          _
      $region40: #{tpu_custom_call.1} parent=5 // pred_fallthru
        _
      %p1089 = scmp.le.s32.totalorder 2, %s14
      // Predicated region
      $region45: #{tpu_custom_call.1} parent=5 // pred_check
        %p1090 = pneg %p1089
      $region46: #{tpu_custom_call.1} parent=5 // pred_check_branch
        %1092 = sbr.rel (%p1090) target = $region48
      $region47: #{tpu_custom_call.1} parent=5 // pred_region
        %s1093 = ssub.s32 %s14, 2
        // Predicated region
        $region49: #{tpu_custom_call.1} parent=47 // pred_check
          %p1094 = pneg %p158
        $region50: #{tpu_custom_call.1} parent=47 // pred_check_branch
          %1096 = sbr.rel (%p1094) target = $region52
        $region51: #{tpu_custom_call.1} parent=47 // pred_region
          %s1097 = sand.u32 %s143, 1
          %s1098 = scalar_lea.sflag [#allocation3], %s1097
          %s1099 = sand.u32 %s143, 1
          %s1100 = scalar_lea.vmem [#allocation2], %s1099
          %1101 = dma.done %s1098, 16
        $region52: #{tpu_custom_call.1} parent=47 // pred_fallthru
          _
      $region48: #{tpu_custom_call.1} parent=5 // pred_fallthru
        _
    $region6: #{tpu_custom_call.1} parent=1 // loop_footer
      %s18 = sadd.s32 1, %s14
    $region7: #{tpu_custom_call.1} parent=1 // loop_footer_branch
      %13 = sbr.rel target = $region3
    $region8: #{tpu_custom_call.1} parent=1 // loop_exit
      _
    %1102 = vsyncpa [#allocation3], 1
    %s1103 = scalar_lea.sflag [#allocation3], 1
    %1104 = vsyncpa %s1103, 1

</llo_original>
